<compile_context>
chip_gen: v5e
topology: v5e:2x2
jax: 0.10.0
libtpu: 0.0.40
codegen_flags: <defaults>
</compile_context>

<pallas_src>
import functools

import jax
import jax.numpy as jnp
from jax.experimental import pallas as pl
from jax.experimental.pallas import tpu as pltpu

INPUT_DIM = 6
HID = 32
OUT_DIM = 8
NUM_LAYERS = 3
BN_EPS = 1e-5
LEAKY_SLOPE = 0.025
NEG_SENTINEL = -1e30
GPB = 8  # graphs per grid step (multiple of 8 -> sublane-aligned output row blocks)


def _leaky_relu(x):
    return jnp.where(x > 0, x, LEAKY_SLOPE * x)


# --------------------------------------- kernel ---------------------------------------
def encoder_gin_kernel(inv_n,
                       x_ref, adj_ref, valid_ref,
                       convw_ref, convb_ref, fcw_ref, fcb_ref,
                       out_ref,
                       y_store_ref, stats_ref):
    p = pl.program_id(0)                     # phase: 0..2 = conv layers, 3 = BN3 + pool + fc
    t = pl.program_id(1)                     # graph-tile index
    gpb, n_max, hid = x_ref.shape
    rows = gpb * n_max

    # Zero this layer's BatchNorm accumulators at the first graph-tile of the phase.
    @pl.when((t == 0) & (p < NUM_LAYERS))
    def _():
        stats_ref[p] = jnp.zeros((2, HID), jnp.float32)

    # Phase 0: stash the (lane-padded) input features as the "layer -1 output".
    @pl.when(p == 0)
    def _():
        y_store_ref[t] = x_ref[...].reshape(rows, hid)

    valid = valid_ref[...].reshape(rows, 1)  # 1.0 real node, 0.0 padding
    y_prev = y_store_ref[t]                  # (rows, HID) f32, pre-BN output of layer p-1

    # BatchNorm of the previous layer's output using the fully-accumulated batch statistics.
    # (At p == 0 the select below falls back to the raw features; the stats read is finite.)
    lm1 = jnp.maximum(p - 1, 0)
    st = stats_ref[lm1]                      # (2, HID): [sum(y), sum(y*y)]
    mean = st[0:1, :] * inv_n
    # NOTE: var = E[y^2] - mean^2 in f32 (single-pass, like fused BN kernels).
    # TODO(synk): cancellation-prone when var << mean^2; a centered second sweep over y_store
    #             would fix it at the cost of one extra phase per layer.
    var = jnp.maximum(st[1:2, :] * inv_n - mean * mean, 0.0)
    pb = convb_ref[lm1]                      # (4, HID): b1, b2, gamma, beta
    xn = pb[2:3, :] * (y_prev - mean) * jax.lax.rsqrt(var + BN_EPS) + pb[3:4, :]
    x_in = jnp.where(p == 0, y_prev, xn)     # (rows, HID) f32

    @pl.when(p < NUM_LAYERS)
    def _conv():
        wb = convw_ref[p]                    # (2*HID, HID) bf16: [W1 ; W2]
        cb = convb_ref[p]                    # (4, HID) f32
        # GIN aggregation, block-diagonal: per-graph (n_max x n_max) @ (n_max x HID),
        # bf16 operands on the MXU, f32 accumulation.
        xg = x_in.astype(jnp.bfloat16).reshape(gpb, n_max, hid)
        agg = jnp.einsum('gij,gjd->gid', adj_ref[...], xg,
                         preferred_element_type=jnp.float32).reshape(rows, hid)
        h = x_in + agg                       # eps = 0
        # Internal MLP (Linear -> ReLU -> Linear), then F.relu after the conv.
        z = jnp.maximum(
            jnp.dot(h.astype(jnp.bfloat16), wb[0:HID, :],
                    preferred_element_type=jnp.float32) + cb[0:1, :], 0.0)
        y = jnp.dot(z.astype(jnp.bfloat16), wb[HID:2 * HID, :],
                    preferred_element_type=jnp.float32) + cb[1:2, :]
        y = jnp.maximum(y, 0.0) * valid      # zero padded rows so stats / next layer stay exact
        y_store_ref[t] = y
        # BatchNorm statistics on the VPU/XLU (sublane reductions), off the MXU.
        upd = jnp.concatenate([jnp.sum(y, axis=0, keepdims=True),
                               jnp.sum(y * y, axis=0, keepdims=True)], axis=0)
        stats_ref[p] = stats_ref[p] + upd

    @pl.when(p == NUM_LAYERS)
    def _pool_and_head():
        # x_in == BN3(y3); global max pool over each graph's own node tile (masked).
        x3 = x_in.reshape(gpb, n_max, hid)
        v3 = valid_ref[...]                  # (gpb, n_max, 1)
        emb = jnp.max(jnp.where(v3 > 0.0, x3, NEG_SENTINEL), axis=1)       # (gpb, HID)
        fw = fcw_ref[...]                    # (4*HID, 2*HID) bf16
        fb = fcb_ref[...]                    # (4, 2*HID) f32
        h1 = _leaky_relu(jnp.dot(emb.astype(jnp.bfloat16), fw[0:HID, :],
                                 preferred_element_type=jnp.float32) + fb[0:1, :])
        h2 = _leaky_relu(jnp.dot(h1.astype(jnp.bfloat16), fw[HID:3 * HID, 0:HID],
                                 preferred_element_type=jnp.float32) + fb[1:2, 0:HID])
        out_ref[...] = jnp.dot(h2.astype(jnp.bfloat16), fw[3 * HID:4 * HID, 0:OUT_DIM],
                               preferred_element_type=jnp.float32) + fb[2:3, 0:OUT_DIM]


# --------------------------------- parameter packing ----------------------------------
def pack_params(params):
    convw = jnp.zeros((NUM_LAYERS, 2 * HID, HID), jnp.float32)
    convw = convw.at[0, 0:INPUT_DIM, :].set(params["c1w1"])
    convw = convw.at[0, HID:2 * HID, :].set(params["c1w2"])
    convw = convw.at[1, 0:HID, :].set(params["c2w1"])
    convw = convw.at[1, HID:2 * HID, :].set(params["c2w2"])
    convw = convw.at[2, 0:HID, :].set(params["c3w1"])
    convw = convw.at[2, HID:2 * HID, :].set(params["c3w2"])

    convb = jnp.zeros((NUM_LAYERS, 4, HID), jnp.float32)
    for l, pre in enumerate(("c1", "c2", "c3")):
        convb = convb.at[l, 0, :].set(params[pre + "b1"].reshape(-1))
        convb = convb.at[l, 1, :].set(params[pre + "b2"].reshape(-1))
    for l, pre in enumerate(("bn1", "bn2", "bn3")):
        convb = convb.at[l, 2, :].set(params[pre + "g"].reshape(-1))
        convb = convb.at[l, 3, :].set(params[pre + "b"].reshape(-1))

    fcw = jnp.zeros((4 * HID, 2 * HID), jnp.float32)
    fcw = fcw.at[0:HID, :].set(params["f1w"])
    fcw = fcw.at[HID:3 * HID, 0:HID].set(params["f2w"])
    fcw = fcw.at[3 * HID:4 * HID, 0:OUT_DIM].set(params["f3w"])

    fcb = jnp.zeros((4, 2 * HID), jnp.float32)
    fcb = fcb.at[0, :].set(params["f1b"].reshape(-1))
    fcb = fcb.at[1, 0:HID].set(params["f2b"].reshape(-1))
    fcb = fcb.at[2, 0:OUT_DIM].set(params["f3b"].reshape(-1))

    return convw.astype(jnp.bfloat16), convb, fcw.astype(jnp.bfloat16), fcb


# ------------------------------------ host-side glue ----------------------------------
def build_graph_blocks(x, edge_index, batch, num_graphs, gpb=GPB):
    """Per-graph padded blocks (nodes of each graph assumed contiguous, PyG-style)."""
    num_nodes = x.shape[0]
    counts = jnp.zeros((num_graphs,), jnp.int32).at[batch].add(1)
    offsets = jnp.concatenate([jnp.zeros((1,), jnp.int32),
                               jnp.cumsum(counts)[:-1].astype(jnp.int32)])
    n_max = int(max(8, -(-int(jnp.max(counts)) // 8) * 8))
    g_pad = -(-num_graphs // gpb) * gpb

    node_g = batch
    node_local = jnp.arange(num_nodes, dtype=jnp.int32) - offsets[node_g]

    x_pad = jnp.zeros((num_nodes, HID), jnp.float32).at[:, :INPUT_DIM].set(
        x.astype(jnp.float32))
    x_blk = jnp.zeros((g_pad, n_max, HID), jnp.float32).at[node_g, node_local].set(x_pad)

    valid = jnp.zeros((g_pad, n_max), jnp.float32).at[node_g, node_local].set(1.0)[..., None]

    # Block-diagonal adjacency: adj[g, dst_local, src_local] += 1 (messages flow src -> dst).
    src, dst = edge_index[0], edge_index[1]
    eg = node_g[dst]
    adj_blk = jnp.zeros((g_pad, n_max, n_max), jnp.float32)
    adj_blk = adj_blk.at[eg, node_local[dst], node_local[src]].add(1.0)

    return x_blk, adj_blk.astype(jnp.bfloat16), valid, n_max, g_pad


def _vmem_limit_bytes(n_max, num_tiles):
    adj_tile = GPB * n_max * n_max * 2
    x_tile = GPB * n_max * HID * 4
    misc = GPB * n_max * 4 + GPB * OUT_DIM * 4
    params = (NUM_LAYERS * 2 * HID * HID * 2 + NUM_LAYERS * 4 * HID * 4
              + 4 * HID * 2 * HID * 2 + 4 * 2 * HID * 4)
    y_store = num_tiles * GPB * n_max * HID * 4
    stats = NUM_LAYERS * 2 * HID * 4
    need = 2 * (adj_tile + x_tile + misc) + params + y_store + stats + (4 << 20)
    try:
        cap = int(pltpu.get_tpu_info().vmem_capacity_bytes)
    except Exception:
        cap = 64 * (1 << 20)
    return int(min(max(need, 32 << 20), int(cap * 0.85)))


def encoder_gin_forward(x, edge_index, batch, num_graphs, params):
    num_nodes = x.shape[0]
    x_blk, adj_blk, valid, n_max, g_pad = build_graph_blocks(x, edge_index, batch, num_graphs)
    convw, convb, fcw, fcb = pack_params(params)
    num_tiles = g_pad // GPB
    inv_n = 1.0 / float(num_nodes)

    def tile_map(p, t):
        return (t, 0, 0)

    def x_map(p, t):
        return (jnp.where(p == 0, t, 0), 0, 0)          # only consumed at phase 0

    def adj_map(p, t):
        return (jnp.where(p < NUM_LAYERS, t, 0), 0, 0)  # not consumed in the final phase

    def const3(p, t):
        return (0, 0, 0)

    def const2(p, t):
        return (0, 0)

    def out_map(p, t):
        # Phases 0..2 park on a dummy trailing block; phase 3 writes the real rows exactly once.
        return (jnp.where(p == NUM_LAYERS, t, num_tiles), 0)

    grid_spec = pltpu.PrefetchScalarGridSpec(
        num_scalar_prefetch=0,
        grid=(NUM_LAYERS + 1, num_tiles),
        in_specs=[
            pl.BlockSpec((GPB, n_max, HID), x_map),
            pl.BlockSpec((GPB, n_max, n_max), adj_map),
            pl.BlockSpec((GPB, n_max, 1), tile_map),
            pl.BlockSpec((NUM_LAYERS, 2 * HID, HID), const3),
            pl.BlockSpec((NUM_LAYERS, 4, HID), const3),
            pl.BlockSpec((4 * HID, 2 * HID), const2),
            pl.BlockSpec((4, 2 * HID), const2),
        ],
        out_specs=pl.BlockSpec((GPB, OUT_DIM), out_map),
        scratch_shapes=[
            pltpu.VMEM((num_tiles, GPB * n_max, HID), jnp.float32),   # pre-BN activations
            pltpu.VMEM((NUM_LAYERS, 2, HID), jnp.float32),            # BN sum / sum-of-squares
        ],
    )

    out_padded = pl.pallas_call(
        functools.partial(encoder_gin_kernel, inv_n),
        out_shape=jax.ShapeDtypeStruct((g_pad + GPB, OUT_DIM), jnp.float32),
        grid_spec=grid_spec,
        compiler_params=pltpu.CompilerParams(
            dimension_semantics=("arbitrary", "arbitrary"),
            vmem_limit_bytes=_vmem_limit_bytes(n_max, num_tiles)),
    )(x_blk, adj_blk, valid, convw, convb, fcw, fcb)
    return out_padded[:num_graphs]


# --------------------------- parameter init (matches PyTorch init) ---------------------------
def _kaiming_normal_fan_out(key, in_dim, out_dim):
    # kaiming_normal_(mode='fan_out', nonlinearity='relu'): std = sqrt(2 / fan_out)
    std = (2.0 / out_dim) ** 0.5
    # stored as [in_dim, out_dim] so x @ W matches PyTorch's x @ W.T convention
    return std * jax.random.normal(key, (in_dim, out_dim), dtype=jnp.float32)


def init_params(key):
    keys = jax.random.split(key, 16)
    p = {}
    p["c1w1"] = _kaiming_normal_fan_out(keys[0], INPUT_DIM, HID)
    p["c1b1"] = jnp.zeros((1, HID), jnp.float32)
    p["c1w2"] = _kaiming_normal_fan_out(keys[1], HID, HID)
    p["c1b2"] = jnp.zeros((1, HID), jnp.float32)
    p["bn1g"] = jnp.ones((1, HID), jnp.float32)
    p["bn1b"] = jnp.zeros((1, HID), jnp.float32)
    p["c2w1"] = _kaiming_normal_fan_out(keys[2], HID, HID)
    p["c2b1"] = jnp.zeros((1, HID), jnp.float32)
    p["c2w2"] = _kaiming_normal_fan_out(keys[3], HID, HID)
    p["c2b2"] = jnp.zeros((1, HID), jnp.float32)
    p["bn2g"] = jnp.ones((1, HID), jnp.float32)
    p["bn2b"] = jnp.zeros((1, HID), jnp.float32)
    p["c3w1"] = _kaiming_normal_fan_out(keys[4], HID, HID)
    p["c3b1"] = jnp.zeros((1, HID), jnp.float32)
    p["c3w2"] = _kaiming_normal_fan_out(keys[5], HID, HID)
    p["c3b2"] = jnp.zeros((1, HID), jnp.float32)
    p["bn3g"] = jnp.ones((1, HID), jnp.float32)
    p["bn3b"] = jnp.zeros((1, HID), jnp.float32)
    p["f1w"] = _kaiming_normal_fan_out(keys[6], HID, 2 * HID)
    p["f1b"] = jnp.zeros((1, 2 * HID), jnp.float32)
    p["f2w"] = _kaiming_normal_fan_out(keys[7], 2 * HID, HID)
    p["f2b"] = jnp.zeros((1, HID), jnp.float32)
    p["f3w"] = _kaiming_normal_fan_out(keys[8], HID, OUT_DIM)
    p["f3b"] = jnp.zeros((1, OUT_DIM), jnp.float32)
    return p


if __name__ == "__main__":
    key = jax.random.PRNGKey(0)
    k_x, k_param = jax.random.split(key, 2)

    # Small synthetic batch: 2 graphs with 8 and 5 nodes (exercises node + graph padding).
    graph_sizes = [8, 5]
    num_graphs = len(graph_sizes)
    num_nodes = sum(graph_sizes)

    x = jax.random.normal(k_x, (num_nodes, INPUT_DIM), dtype=jnp.float32)

    # Deterministic edges: a bidirectional ring within each graph.
    srcs, dsts = [], []
    base = 0
    for n in graph_sizes:
        for i in range(n):
            a, b = base + i, base + (i + 1) % n
            srcs += [a, b]
            dsts += [b, a]
        base += n
    edge_index = jnp.array([srcs, dsts], dtype=jnp.int32)   # [2, E]

    batch = jnp.concatenate([jnp.full((n,), g, jnp.int32)
                             for g, n in enumerate(graph_sizes)])

    params = init_params(k_param)

    out = encoder_gin_forward(x, edge_index, batch, num_graphs, params)
    out = jax.block_until_ready(out)
    assert out.shape == (num_graphs, OUT_DIM)
    assert bool(jnp.all(jnp.isfinite(out)))
    print("KERNEL_OK")
</pallas_src>

<mosaic_0001>
module attributes {stable_mosaic.version = 11 : i64} {
  func.func @encoder_gin_kernel(%arg0: i32, %arg1: i32, %arg2: memref<8x8x32xf32, #tpu.memory_space<vmem>>, %arg3: memref<8x8x8xbf16, #tpu.memory_space<vmem>>, %arg4: memref<8x8x1xf32, #tpu.memory_space<vmem>>, %arg5: memref<3x64x32xbf16, #tpu.memory_space<vmem>>, %arg6: memref<3x4x32xf32, #tpu.memory_space<vmem>>, %arg7: memref<128x64xbf16, #tpu.memory_space<vmem>>, %arg8: memref<4x64xf32, #tpu.memory_space<vmem>>, %arg9: memref<8x8xf32, #tpu.memory_space<vmem>>, %arg10: memref<1x64x32xf32, #tpu.memory_space<vmem>>, %arg11: memref<3x2x32xf32, #tpu.memory_space<vmem>>) attributes {dimension_semantics = [#tpu.dimension_semantics<arbitrary>, #tpu.dimension_semantics<arbitrary>], iteration_bounds = array<i64: 4, 1>, scalar_prefetch = 0 : i64, scratch_operands = 2 : i64, tpu.core_type = #tpu.core_type<tc>, window_params = [{transform_indices = @transform_0, window_bounds = array<i64: 8, 8, 32>}, {transform_indices = @transform_1, window_bounds = array<i64: 8, 8, 8>}, {transform_indices = @transform_2, window_bounds = array<i64: 8, 8, 1>}, {pipeline_mode = #tpu.pipeline_mode<synchronous>, transform_indices = @transform_3, window_bounds = array<i64: 3, 64, 32>}, {pipeline_mode = #tpu.pipeline_mode<synchronous>, transform_indices = @transform_4, window_bounds = array<i64: 3, 4, 32>}, {pipeline_mode = #tpu.pipeline_mode<synchronous>, transform_indices = @transform_5, window_bounds = array<i64: 128, 64>}, {pipeline_mode = #tpu.pipeline_mode<synchronous>, transform_indices = @transform_6, window_bounds = array<i64: 4, 64>}, {transform_indices = @transform_7, window_bounds = array<i64: 8, 8>}]} {
    %c0_i32 = arith.constant 0 : i32
    %0 = arith.cmpi eq, %arg1, %c0_i32 : i32
    %c3_i32 = arith.constant 3 : i32
    %1 = arith.cmpi slt, %arg0, %c3_i32 : i32
    %2 = arith.andi %0, %1 : i1
    %3 = arith.extui %2 : i1 to i32
    %c0_i32_0 = arith.constant 0 : i32
    %4 = arith.cmpi ne, %3, %c0_i32_0 : i32
    scf.if %4 {
      %cst_20 = arith.constant 0.000000e+00 : f32
      %52 = vector.broadcast %cst_20 : f32 to vector<2x32xf32>
      %53 = arith.index_cast %arg0 : i32 to index
      %c0_21 = arith.constant 0 : index
      %c0_22 = arith.constant 0 : index
      %54 = vector.load %arg11[%53, %c0_21, %c0_22] : memref<3x2x32xf32, #tpu.memory_space<vmem>>, vector<1x2x32xf32>
      %55 = vector.shape_cast %54 : vector<1x2x32xf32> to vector<2x32xf32>
      %56 = vector.shape_cast %52 : vector<2x32xf32> to vector<1x2x32xf32>
      tpu.vector_store %arg11[%53, %c0_21, %c0_22], %56 {strides = array<i32>} : memref<3x2x32xf32, #tpu.memory_space<vmem>>, vector<1x2x32xf32>,
    } else {
    }
    %c0_i32_1 = arith.constant 0 : i32
    %5 = arith.cmpi eq, %arg0, %c0_i32_1 : i32
    %6 = arith.extui %5 : i1 to i32
    %c0_i32_2 = arith.constant 0 : i32
    %7 = arith.cmpi ne, %6, %c0_i32_2 : i32
    scf.if %7 {
      %c0_20 = arith.constant 0 : index
      %c0_21 = arith.constant 0 : index
      %c0_22 = arith.constant 0 : index
      %52 = vector.load %arg2[%c0_20, %c0_21, %c0_22] : memref<8x8x32xf32, #tpu.memory_space<vmem>>, vector<8x8x32xf32>
      %53 = vector.shape_cast %52 : vector<8x8x32xf32> to vector<64x32xf32>
      %54 = arith.index_cast %arg1 : i32 to index
      %c0_23 = arith.constant 0 : index
      %c0_24 = arith.constant 0 : index
      %55 = vector.load %arg10[%54, %c0_23, %c0_24] : memref<1x64x32xf32, #tpu.memory_space<vmem>>, vector<1x64x32xf32>
      %56 = vector.shape_cast %55 : vector<1x64x32xf32> to vector<64x32xf32>
      %57 = vector.shape_cast %53 : vector<64x32xf32> to vector<1x64x32xf32>
      tpu.vector_store %arg10[%54, %c0_23, %c0_24], %57 {strides = array<i32>} : memref<1x64x32xf32, #tpu.memory_space<vmem>>, vector<1x64x32xf32>,
    } else {
    }
    %c0 = arith.constant 0 : index
    %c0_3 = arith.constant 0 : index
    %c0_4 = arith.constant 0 : index
    %8 = vector.load %arg4[%c0, %c0_3, %c0_4] : memref<8x8x1xf32, #tpu.memory_space<vmem>>, vector<8x8x1xf32>
    %9 = vector.shape_cast %8 : vector<8x8x1xf32> to vector<64x1xf32>
    %10 = arith.index_cast %arg1 : i32 to index
    %c0_5 = arith.constant 0 : index
    %c0_6 = arith.constant 0 : index
    %11 = vector.load %arg10[%10, %c0_5, %c0_6] : memref<1x64x32xf32, #tpu.memory_space<vmem>>, vector<1x64x32xf32>
    %12 = vector.shape_cast %11 : vector<1x64x32xf32> to vector<64x32xf32>
    %c1_i32 = arith.constant 1 : i32
    %13 = arith.subi %arg0, %c1_i32 : i32
    %c0_i32_7 = arith.constant 0 : i32
    %14 = arith.maxsi %13, %c0_i32_7 : i32
    %15 = arith.index_cast %14 : i32 to index
    %c0_8 = arith.constant 0 : index
    %c0_9 = arith.constant 0 : index
    %16 = vector.load %arg11[%15, %c0_8, %c0_9] : memref<3x2x32xf32, #tpu.memory_space<vmem>>, vector<1x2x32xf32>
    %17 = vector.shape_cast %16 : vector<1x2x32xf32> to vector<2x32xf32>
    %18 = vector.extract_strided_slice %17 {offsets = [0, 0], sizes = [1, 32], strides = [1, 1]} : vector<2x32xf32> to vector<1x32xf32>
    %cst = arith.constant 0.0769230798 : f32
    %19 = vector.broadcast %cst : f32 to vector<1x32xf32>
    %20 = arith.mulf %18, %19 : vector<1x32xf32>
    %21 = vector.extract_strided_slice %17 {offsets = [1, 0], sizes = [1, 32], strides = [1, 1]} : vector<2x32xf32> to vector<1x32xf32>
    %cst_10 = arith.constant 0.0769230798 : f32
    %22 = vector.broadcast %cst_10 : f32 to vector<1x32xf32>
    %23 = arith.mulf %21, %22 : vector<1x32xf32>
    %24 = arith.mulf %20, %20 : vector<1x32xf32>
    %25 = arith.subf %23, %24 : vector<1x32xf32>
    %cst_11 = arith.constant 0.000000e+00 : f32
    %26 = vector.broadcast %cst_11 : f32 to vector<1x32xf32>
    %27 = arith.maximumf %25, %26 : vector<1x32xf32>
    %28 = arith.index_cast %14 : i32 to index
    %c0_12 = arith.constant 0 : index
    %c0_13 = arith.constant 0 : index
    %29 = vector.load %arg6[%28, %c0_12, %c0_13] : memref<3x4x32xf32, #tpu.memory_space<vmem>>, vector<1x4x32xf32>
    %30 = vector.shape_cast %29 : vector<1x4x32xf32> to vector<4x32xf32>
    %31 = vector.extract_strided_slice %30 {offsets = [2, 0], sizes = [1, 32], strides = [1, 1]} : vector<4x32xf32> to vector<1x32xf32>
    %32 = vector.broadcast %20 : vector<1x32xf32> to vector<64x32xf32>
    %33 = arith.subf %12, %32 : vector<64x32xf32>
    %34 = vector.broadcast %31 : vector<1x32xf32> to vector<64x32xf32>
    %35 = arith.mulf %34, %33 : vector<64x32xf32>
    %cst_14 = arith.constant 9.99999974E-6 : f32
    %36 = vector.broadcast %cst_14 : f32 to vector<1x32xf32>
    %37 = arith.addf %27, %36 : vector<1x32xf32>
    %38 = math.rsqrt %37 : vector<1x32xf32>
    %39 = vector.broadcast %38 : vector<1x32xf32> to vector<64x32xf32>
    %40 = arith.mulf %35, %39 : vector<64x32xf32>
    %41 = vector.extract_strided_slice %30 {offsets = [3, 0], sizes = [1, 32], strides = [1, 1]} : vector<4x32xf32> to vector<1x32xf32>
    %42 = vector.broadcast %41 : vector<1x32xf32> to vector<64x32xf32>
    %43 = arith.addf %40, %42 : vector<64x32xf32>
    %c0_i32_15 = arith.constant 0 : i32
    %44 = arith.cmpi eq, %arg0, %c0_i32_15 : i32
    %45 = arith.select %44, %12, %43 : vector<64x32xf32>
    %c3_i32_16 = arith.constant 3 : i32
    %46 = arith.cmpi slt, %arg0, %c3_i32_16 : i32
    %47 = arith.extui %46 : i1 to i32
    %c0_i32_17 = arith.constant 0 : i32
    %48 = arith.cmpi ne, %47, %c0_i32_17 : i32
    scf.if %48 {
      %52 = arith.index_cast %arg0 : i32 to index
      %c0_20 = arith.constant 0 : index
      %c0_21 = arith.constant 0 : index
      %53 = vector.load %arg5[%52, %c0_20, %c0_21] : memref<3x64x32xbf16, #tpu.memory_space<vmem>>, vector<1x64x32xbf16>
      %54 = vector.shape_cast %53 : vector<1x64x32xbf16> to vector<64x32xbf16>
      %55 = arith.index_cast %arg0 : i32 to index
      %c0_22 = arith.constant 0 : index
      %c0_23 = arith.constant 0 : index
      %56 = vector.load %arg6[%55, %c0_22, %c0_23] : memref<3x4x32xf32, #tpu.memory_space<vmem>>, vector<1x4x32xf32>
      %57 = vector.shape_cast %56 : vector<1x4x32xf32> to vector<4x32xf32>
      %58 = arith.truncf %45 : vector<64x32xf32> to vector<64x32xbf16>
      %59 = vector.shape_cast %58 : vector<64x32xbf16> to vector<8x8x32xbf16>
      %c0_24 = arith.constant 0 : index
      %c0_25 = arith.constant 0 : index
      %c0_26 = arith.constant 0 : index
      %60 = vector.load %arg3[%c0_24, %c0_25, %c0_26] : memref<8x8x8xbf16, #tpu.memory_space<vmem>>, vector<8x8x8xbf16>
      "tpu.trace_start"() <{level = 10 : i32, message = "gij,gjd->gid"}> : () -> ()
      %cst_27 = arith.constant dense<0.000000e+00> : vector<8x8x32xf32>
      %61 = tpu.matmul %60, %59, %cst_27 {dimension_numbers = #tpu.dot_dimension_numbers<[2], [1], [1], [2], [0, 0, 0, 1, 1, 2], [0], [0]>} : vector<8x8x8xbf16>, vector<8x8x32xbf16>, vector<8x8x32xf32> -> vector<8x8x32xf32>
      "tpu.trace_stop"() : () -> ()
      %62 = vector.shape_cast %61 : vector<8x8x32xf32> to vector<64x32xf32>
      %63 = arith.addf %45, %62 : vector<64x32xf32>
      %64 = arith.truncf %63 : vector<64x32xf32> to vector<64x32xbf16>
      %65 = vector.extract_strided_slice %54 {offsets = [0, 0], sizes = [32, 32], strides = [1, 1]} : vector<64x32xbf16> to vector<32x32xbf16>
      %cst_28 = arith.constant dense<0.000000e+00> : vector<64x32xf32>
      %66 = tpu.matmul %64, %65, %cst_28 {dimension_numbers = #tpu.dot_dimension_numbers<[1], [0], [0], [1], [0, 0, 1, 1], [], []>} : vector<64x32xbf16>, vector<32x32xbf16>, vector<64x32xf32> -> vector<64x32xf32>
      %67 = vector.extract_strided_slice %57 {offsets = [0, 0], sizes = [1, 32], strides = [1, 1]} : vector<4x32xf32> to vector<1x32xf32>
      %68 = vector.broadcast %67 : vector<1x32xf32> to vector<64x32xf32>
      %69 = arith.addf %66, %68 : vector<64x32xf32>
      %cst_29 = arith.constant 0.000000e+00 : f32
      %70 = vector.broadcast %cst_29 : f32 to vector<64x32xf32>
      %71 = arith.maximumf %69, %70 : vector<64x32xf32>
      %72 = arith.truncf %71 : vector<64x32xf32> to vector<64x32xbf16>
      %73 = vector.extract_strided_slice %54 {offsets = [32, 0], sizes = [32, 32], strides = [1, 1]} : vector<64x32xbf16> to vector<32x32xbf16>
      %cst_30 = arith.constant dense<0.000000e+00> : vector<64x32xf32>
      %74 = tpu.matmul %72, %73, %cst_30 {dimension_numbers = #tpu.dot_dimension_numbers<[1], [0], [0], [1], [0, 0, 1, 1], [], []>} : vector<64x32xbf16>, vector<32x32xbf16>, vector<64x32xf32> -> vector<64x32xf32>
      %75 = vector.extract_strided_slice %57 {offsets = [1, 0], sizes = [1, 32], strides = [1, 1]} : vector<4x32xf32> to vector<1x32xf32>
      %76 = vector.broadcast %75 : vector<1x32xf32> to vector<64x32xf32>
      %77 = arith.addf %74, %76 : vector<64x32xf32>
      %cst_31 = arith.constant 0.000000e+00 : f32
      %78 = vector.broadcast %cst_31 : f32 to vector<64x32xf32>
      %79 = arith.maximumf %77, %78 : vector<64x32xf32>
      %80 = vector.broadcast %9 : vector<64x1xf32> to vector<64x32xf32>
      %81 = arith.mulf %79, %80 : vector<64x32xf32>
      %82 = arith.index_cast %arg1 : i32 to index
      %c0_32 = arith.constant 0 : index
      %c0_33 = arith.constant 0 : index
      %83 = vector.load %arg10[%82, %c0_32, %c0_33] : memref<1x64x32xf32, #tpu.memory_space<vmem>>, vector<1x64x32xf32>
      %84 = vector.shape_cast %83 : vector<1x64x32xf32> to vector<64x32xf32>
      %85 = vector.shape_cast %81 : vector<64x32xf32> to vector<1x64x32xf32>
      tpu.vector_store %arg10[%82, %c0_32, %c0_33], %85 {strides = array<i32>} : memref<1x64x32xf32, #tpu.memory_space<vmem>>, vector<1x64x32xf32>,
      %cst_34 = arith.constant dense<0.000000e+00> : vector<32xf32>
      %86 = vector.multi_reduction <add>, %81, %cst_34 [0] : vector<64x32xf32> to vector<32xf32>
      %87 = vector.shape_cast %86 : vector<32xf32> to vector<1x32xf32>
      %88 = arith.mulf %81, %81 : vector<64x32xf32>
      %cst_35 = arith.constant dense<0.000000e+00> : vector<32xf32>
      %89 = vector.multi_reduction <add>, %88, %cst_35 [0] : vector<64x32xf32> to vector<32xf32>
      %90 = vector.shape_cast %89 : vector<32xf32> to vector<1x32xf32>
      %91 = tpu.concatenate %87, %90 in 0 : vector<1x32xf32>, vector<1x32xf32> -> vector<2x32xf32>
      %92 = arith.index_cast %arg0 : i32 to index
      %c0_36 = arith.constant 0 : index
      %c0_37 = arith.constant 0 : index
      %93 = vector.load %arg11[%92, %c0_36, %c0_37] : memref<3x2x32xf32, #tpu.memory_space<vmem>>, vector<1x2x32xf32>
      %94 = vector.shape_cast %93 : vector<1x2x32xf32> to vector<2x32xf32>
      %95 = arith.addf %94, %91 : vector<2x32xf32>
      %96 = arith.index_cast %arg0 : i32 to index
      %c0_38 = arith.constant 0 : index
      %c0_39 = arith.constant 0 : index
      %97 = vector.load %arg11[%96, %c0_38, %c0_39] : memref<3x2x32xf32, #tpu.memory_space<vmem>>, vector<1x2x32xf32>
      %98 = vector.shape_cast %97 : vector<1x2x32xf32> to vector<2x32xf32>
      %99 = vector.shape_cast %95 : vector<2x32xf32> to vector<1x2x32xf32>
      tpu.vector_store %arg11[%96, %c0_38, %c0_39], %99 {strides = array<i32>} : memref<3x2x32xf32, #tpu.memory_space<vmem>>, vector<1x2x32xf32>,
    } else {
    }
    %c3_i32_18 = arith.constant 3 : i32
    %49 = arith.cmpi eq, %arg0, %c3_i32_18 : i32
    %50 = arith.extui %49 : i1 to i32
    %c0_i32_19 = arith.constant 0 : i32
    %51 = arith.cmpi ne, %50, %c0_i32_19 : i32
    scf.if %51 {
      %52 = vector.shape_cast %45 : vector<64x32xf32> to vector<8x8x32xf32>
      %c0_20 = arith.constant 0 : index
      %c0_21 = arith.constant 0 : index
      %c0_22 = arith.constant 0 : index
      %53 = vector.load %arg4[%c0_20, %c0_21, %c0_22] : memref<8x8x1xf32, #tpu.memory_space<vmem>>, vector<8x8x1xf32>
      %cst_23 = arith.constant 0.000000e+00 : f32
      %54 = vector.broadcast %cst_23 : f32 to vector<8x8x1xf32>
      %55 = arith.cmpf ogt, %53, %54 : vector<8x8x1xf32>
      %cst_24 = arith.constant -1.000000e+30 : f32
      %56 = vector.shape_cast %55 : vector<8x8x1xi1> to vector<8x8x1xi1>
      %57 = vector.broadcast %56 : vector<8x8x1xi1> to vector<8x8x32xi1>
      %58 = vector.broadcast %cst_24 : f32 to vector<8x8x32xf32>
      %59 = arith.select %57, %52, %58 : vector<8x8x32xi1>, vector<8x8x32xf32>
      %cst_25 = arith.constant dense<0xFF800000> : vector<8x32xf32>
      %60 = vector.multi_reduction <maximumf>, %59, %cst_25 [1] : vector<8x8x32xf32> to vector<8x32xf32>
      %c0_26 = arith.constant 0 : index
      %c0_27 = arith.constant 0 : index
      %61 = vector.load %arg7[%c0_26, %c0_27] : memref<128x64xbf16, #tpu.memory_space<vmem>>, vector<128x64xbf16>
      %c0_28 = arith.constant 0 : index
      %c0_29 = arith.constant 0 : index
      %62 = vector.load %arg8[%c0_28, %c0_29] : memref<4x64xf32, #tpu.memory_space<vmem>>, vector<4x64xf32>
      %63 = arith.truncf %60 : vector<8x32xf32> to vector<8x32xbf16>
      %64 = vector.extract_strided_slice %61 {offsets = [0, 0], sizes = [32, 64], strides = [1, 1]} : vector<128x64xbf16> to vector<32x64xbf16>
      %cst_30 = arith.constant dense<0.000000e+00> : vector<8x64xf32>
      %65 = tpu.matmul %63, %64, %cst_30 {dimension_numbers = #tpu.dot_dimension_numbers<[1], [0], [0], [1], [0, 0, 1, 1], [], []>} : vector<8x32xbf16>, vector<32x64xbf16>, vector<8x64xf32> -> vector<8x64xf32>
      %66 = vector.extract_strided_slice %62 {offsets = [0, 0], sizes = [1, 64], strides = [1, 1]} : vector<4x64xf32> to vector<1x64xf32>
      %67 = vector.broadcast %66 : vector<1x64xf32> to vector<8x64xf32>
      %68 = arith.addf %65, %67 : vector<8x64xf32>
      %cst_31 = arith.constant 0.000000e+00 : f32
      %69 = vector.broadcast %cst_31 : f32 to vector<8x64xf32>
      %70 = arith.cmpf ogt, %68, %69 : vector<8x64xf32>
      %cst_32 = arith.constant 2.500000e-02 : f32
      %71 = vector.broadcast %cst_32 : f32 to vector<8x64xf32>
      %72 = arith.mulf %71, %68 : vector<8x64xf32>
      %73 = arith.select %70, %68, %72 : vector<8x64xi1>, vector<8x64xf32>
      %74 = arith.truncf %73 : vector<8x64xf32> to vector<8x64xbf16>
      %75 = vector.extract_strided_slice %61 {offsets = [32, 0], sizes = [64, 32], strides = [1, 1]} : vector<128x64xbf16> to vector<64x32xbf16>
      %cst_33 = arith.constant dense<0.000000e+00> : vector<8x32xf32>
      %76 = tpu.matmul %74, %75, %cst_33 {dimension_numbers = #tpu.dot_dimension_numbers<[1], [0], [0], [1], [0, 0, 1, 1], [], []>} : vector<8x64xbf16>, vector<64x32xbf16>, vector<8x32xf32> -> vector<8x32xf32>
      %77 = vector.extract_strided_slice %62 {offsets = [1, 0], sizes = [1, 32], strides = [1, 1]} : vector<4x64xf32> to vector<1x32xf32>
      %78 = vector.broadcast %77 : vector<1x32xf32> to vector<8x32xf32>
      %79 = arith.addf %76, %78 : vector<8x32xf32>
      %cst_34 = arith.constant 0.000000e+00 : f32
      %80 = vector.broadcast %cst_34 : f32 to vector<8x32xf32>
      %81 = arith.cmpf ogt, %79, %80 : vector<8x32xf32>
      %cst_35 = arith.constant 2.500000e-02 : f32
      %82 = vector.broadcast %cst_35 : f32 to vector<8x32xf32>
      %83 = arith.mulf %82, %79 : vector<8x32xf32>
      %84 = arith.select %81, %79, %83 : vector<8x32xi1>, vector<8x32xf32>
      %85 = arith.truncf %84 : vector<8x32xf32> to vector<8x32xbf16>
      %86 = vector.extract_strided_slice %61 {offsets = [96, 0], sizes = [32, 8], strides = [1, 1]} : vector<128x64xbf16> to vector<32x8xbf16>
      %cst_36 = arith.constant dense<0.000000e+00> : vector<8x8xf32>
      %87 = tpu.matmul %85, %86, %cst_36 {dimension_numbers = #tpu.dot_dimension_numbers<[1], [0], [0], [1], [0, 0, 1, 1], [], []>} : vector<8x32xbf16>, vector<32x8xbf16>, vector<8x8xf32> -> vector<8x8xf32>
      %88 = vector.extract_strided_slice %62 {offsets = [2, 0], sizes = [1, 8], strides = [1, 1]} : vector<4x64xf32> to vector<1x8xf32>
      %89 = vector.broadcast %88 : vector<1x8xf32> to vector<8x8xf32>
      %90 = arith.addf %87, %89 : vector<8x8xf32>
      %c0_37 = arith.constant 0 : index
      %c0_38 = arith.constant 0 : index
      %91 = vector.load %arg9[%c0_37, %c0_38] : memref<8x8xf32, #tpu.memory_space<vmem>>, vector<8x8xf32>
      tpu.vector_store %arg9[%c0_37, %c0_38], %90 {strides = array<i32>} : memref<8x8xf32, #tpu.memory_space<vmem>>, vector<8x8xf32>,
    } else {
    }
    return
  }
  func.func @transform_0(%arg0: i32, %arg1: i32) -> (i32, i32, i32) {
    %c0_i32 = arith.constant 0 : i32
    %0 = arith.cmpi eq, %arg0, %c0_i32 : i32
    %c0_i32_0 = arith.constant 0 : i32
    %1 = arith.select %0, %arg1, %c0_i32_0 : i32
    %c0_i32_1 = arith.constant 0 : i32
    %c0_i32_2 = arith.constant 0 : i32
    %c0_i32_3 = arith.constant 0 : i32
    return %1, %c0_i32_1, %c0_i32_2 : i32, i32, i32
  }
  func.func @transform_1(%arg0: i32, %arg1: i32) -> (i32, i32, i32) {
    %c3_i32 = arith.constant 3 : i32
    %0 = arith.cmpi slt, %arg0, %c3_i32 : i32
    %c0_i32 = arith.constant 0 : i32
    %1 = arith.select %0, %arg1, %c0_i32 : i32
    %c0_i32_0 = arith.constant 0 : i32
    %c0_i32_1 = arith.constant 0 : i32
    %c0_i32_2 = arith.constant 0 : i32
    return %1, %c0_i32_0, %c0_i32_1 : i32, i32, i32
  }
  func.func @transform_2(%arg0: i32, %arg1: i32) -> (i32, i32, i32) {
    %c0_i32 = arith.constant 0 : i32
    %c0_i32_0 = arith.constant 0 : i32
    %c0_i32_1 = arith.constant 0 : i32
    return %arg1, %c0_i32, %c0_i32_0 : i32, i32, i32
  }
  func.func @transform_3(%arg0: i32, %arg1: i32) -> (i32, i32, i32) {
    %c0_i32 = arith.constant 0 : i32
    %c0_i32_0 = arith.constant 0 : i32
    %c0_i32_1 = arith.constant 0 : i32
    %c0_i32_2 = arith.constant 0 : i32
    return %c0_i32, %c0_i32_0, %c0_i32_1 : i32, i32, i32
  }
  func.func @transform_4(%arg0: i32, %arg1: i32) -> (i32, i32, i32) {
    %c0_i32 = arith.constant 0 : i32
    %c0_i32_0 = arith.constant 0 : i32
    %c0_i32_1 = arith.constant 0 : i32
    %c0_i32_2 = arith.constant 0 : i32
    return %c0_i32, %c0_i32_0, %c0_i32_1 : i32, i32, i32
  }
  func.func @transform_5(%arg0: i32, %arg1: i32) -> (i32, i32) {
    %c0_i32 = arith.constant 0 : i32
    %c0_i32_0 = arith.constant 0 : i32
    %c0_i32_1 = arith.constant 0 : i32
    return %c0_i32, %c0_i32_0 : i32, i32
  }
  func.func @transform_6(%arg0: i32, %arg1: i32) -> (i32, i32) {
    %c0_i32 = arith.constant 0 : i32
    %c0_i32_0 = arith.constant 0 : i32
    %c0_i32_1 = arith.constant 0 : i32
    return %c0_i32, %c0_i32_0 : i32, i32
  }
  func.func @transform_7(%arg0: i32, %arg1: i32) -> (i32, i32) {
    %c3_i32 = arith.constant 3 : i32
    %0 = arith.cmpi eq, %arg0, %c3_i32 : i32
    %c1_i32 = arith.constant 1 : i32
    %1 = arith.select %0, %arg1, %c1_i32 : i32
    %c0_i32 = arith.constant 0 : i32
    %c0_i32_0 = arith.constant 0 : i32
    return %1, %c0_i32 : i32, i32
  }
}

</mosaic_0001>

<llo_original>
// kernel: tpu_custom_call.1
$region0: #{tpu_custom_call.1}
  #allocation0 [shape = 'u32[]', space=smem, size = 0x4, offset = 0x4, fixed_abs, tag = 'smem constant byte address 0x4 - core index']
  #allocation1 [shape = 'u32[72,128]{1,0:T(1,128)}', space=vmem, size = 0x9000, scoped, tag = 'internal scratch']
  #allocation2 [shape = 'f32[1,64,32]{2,1,0:T(8,128)}', space=vmem, size = 0x8000, scoped, tag = 'scratch operand']
  #allocation3 [shape = 'f32[3,2,32]{2,1,0:T(2,128)}', space=vmem, size = 0xc00, scoped, tag = 'scratch operand']
  %s0 = inlined_call_operand.vmem [shape: f32[8,8,32], index: 0, kind: input, shape index: {}]
  %s1 = inlined_call_operand.vmem [shape: bf16[8,8,8], index: 1, kind: input, shape index: {}]
  %s2 = inlined_call_operand.vmem [shape: f32[8,8,1], index: 2, kind: input, shape index: {}]
  %s3 = inlined_call_operand.vmem [shape: bf16[3,64,32], index: 3, kind: input, shape index: {}]
  %s4 = inlined_call_operand.vmem [shape: f32[3,4,32], index: 4, kind: input, shape index: {}]
  %s5 = inlined_call_operand.vmem [shape: bf16[128,64], index: 5, kind: input, shape index: {}]
  %s6 = inlined_call_operand.vmem [shape: f32[4,64], index: 6, kind: input, shape index: {}]
  %s7 = inlined_call_operand.vmem [shape: f32[16,8], index: 7, kind: output, shape index: {}]
  %s8 = sld [smem:[#allocation0]]
  $region77: #{tpu_custom_call.1} parent=0
    _
  %s10 = ssub.s32 1, %s8
  %s11 = scalar_select 0, %s10, %s8
  loop: start=0, step=1, limit=6
  $region2: #{tpu_custom_call.1} parent=0 // loop_pre_header
    _
  $region3: #{tpu_custom_call.1} parent=0 // loop_header
    %s13 = sphi 0, %s17
    %p14 = scmp.ge.s32.totalorder %s13, 6
    %s20 = sphi 0, %s32
    %s21 = sphi 0, %s28
    %s22 = sphi 0, %s20
    %s23 = sphi 0, %s21
    %s24 = sphi 0, %s22
    %s25 = sphi 0, %s23
    %s39 = sphi 0, %s41
    %s42 = sphi 0, %s39
    %s43 = sphi 0, %s42
    %s59 = sphi 0, %s43
    %s69 = sphi 0, %s71
    %s72 = sphi 0, %s69
    %s73 = sphi 0, %s72
    %s89 = sphi 0, %s73
    %s95 = sphi 0, %s97
    %s98 = sphi 0, %s95
    %s99 = sphi 0, %s98
    %s115 = sphi 0, %s99
    %s119 = sphi 0, %s119
    %s121 = sphi 0, %s119
    %s122 = sphi 0, %s121
    %s136 = sphi 0, %s122
    %s140 = sphi 0, %s140
    %s142 = sphi 0, %s140
    %s143 = sphi 0, %s142
    %s157 = sphi 0, %s143
    %s161 = sphi 0, %s161
    %s163 = sphi 0, %s161
    %s164 = sphi 0, %s163
    %s178 = sphi 0, %s164
    %s182 = sphi 0, %s182
    %s184 = sphi 0, %s182
    %s185 = sphi 0, %s184
    %s199 = sphi 0, %s185
    %s209 = sphi 0, %s211
    %s212 = sphi 0, %s209
    %s213 = sphi 0, %s212
    %s229 = sphi 0, %s213
  $region4: #{tpu_custom_call.1} parent=0 // loop_header_branch
    %16 = sbr.rel (%p14) target = $region8
  $region5: #{tpu_custom_call.1} parent=0 // loop_body
    %s18 = ssub.s32 %s13, 1
    %s19 = ssub.s32 %s13, 2
    %s26 = sadd.s32 1, %s21
    %p27 = scmp.ge.s32.totalorder %s26, 1
    %s28 = scalar_select %p27, 0, %s26
    %s29 = sadd.s32 1, %s20
    %s30 = scalar_select %p27, %s29, %s20
    %p31 = scmp.ge.s32.totalorder %s30, 4
    %s32 = scalar_select %p31, 0, %s30
    %p33 = scmp.eq.s32.totalorder %s20, 0
    %s34 = scalar_select %p33, %s21, 0
    %p35 = scmp.eq.s32.totalorder %s32, 0
    %s36 = scalar_select %p35, %s28, 0
    %s37 = ssub.s32 %s34, %s36
    %p38 = scmp.eq.s32.totalorder %s37, 0
    %s40 = sadd.s32 %s39, 1
    %s41 = scalar_select %p38, %s39, %s40
    %p44 = pneg %p38
    %p45 = scmp.eq.s32.totalorder %s13, 3
    %p46 = por %p44, %p45
    %p47 = scmp.ne.s32.totalorder %s39, %s42
    %p48 = scmp.eq.s32.totalorder %s13, 0
    %p49 = por %p47, %p48
    %p50 = scmp.ne.s32.totalorder %s39, %s42
    %p51 = scmp.eq.s32.totalorder %s18, 3
    %p52 = por %p50, %p51
    %p53 = scmp.ne.s32.totalorder %s42, %s43
    %p54 = scmp.eq.s32.totalorder %s18, 0
    %p55 = por %p53, %p54
    %p56 = scmp.ne.s32.totalorder %s42, %s43
    %p57 = scmp.eq.s32.totalorder %s19, 3
    %p58 = por %p56, %p57
    %p60 = scmp.ne.s32.totalorder %s43, %s59
    %p61 = scmp.eq.s32.totalorder %s19, 0
    %p62 = por %p60, %p61
    %p63 = scmp.lt.s32.totalorder %s20, 3
    %s64 = scalar_select %p63, %s21, 0
    %p65 = scmp.lt.s32.totalorder %s32, 3
    %s66 = scalar_select %p65, %s28, 0
    %s67 = ssub.s32 %s64, %s66
    %p68 = scmp.eq.s32.totalorder %s67, 0
    %s70 = sadd.s32 %s69, 1
    %s71 = scalar_select %p68, %s69, %s70
    %p74 = pneg %p68
    %p75 = scmp.eq.s32.totalorder %s13, 3
    %p76 = por %p74, %p75
    %p77 = scmp.ne.s32.totalorder %s69, %s72
    %p78 = scmp.eq.s32.totalorder %s13, 0
    %p79 = por %p77, %p78
    %p80 = scmp.ne.s32.totalorder %s69, %s72
    %p81 = scmp.eq.s32.totalorder %s18, 3
    %p82 = por %p80, %p81
    %p83 = scmp.ne.s32.totalorder %s72, %s73
    %p84 = scmp.eq.s32.totalorder %s18, 0
    %p85 = por %p83, %p84
    %p86 = scmp.ne.s32.totalorder %s72, %s73
    %p87 = scmp.eq.s32.totalorder %s19, 3
    %p88 = por %p86, %p87
    %p90 = scmp.ne.s32.totalorder %s73, %s89
    %p91 = scmp.eq.s32.totalorder %s19, 0
    %p92 = por %p90, %p91
    %s93 = ssub.s32 %s21, %s28
    %p94 = scmp.eq.s32.totalorder %s93, 0
    %s96 = sadd.s32 %s95, 1
    %s97 = scalar_select %p94, %s95, %s96
    %p100 = pneg %p94
    %p101 = scmp.eq.s32.totalorder %s13, 3
    %p102 = por %p100, %p101
    %p103 = scmp.ne.s32.totalorder %s95, %s98
    %p104 = scmp.eq.s32.totalorder %s13, 0
    %p105 = por %p103, %p104
    %p106 = scmp.ne.s32.totalorder %s95, %s98
    %p107 = scmp.eq.s32.totalorder %s18, 3
    %p108 = por %p106, %p107
    %p109 = scmp.ne.s32.totalorder %s98, %s99
    %p110 = scmp.eq.s32.totalorder %s18, 0
    %p111 = por %p109, %p110
    %p112 = scmp.ne.s32.totalorder %s98, %s99
    %p113 = scmp.eq.s32.totalorder %s19, 3
    %p114 = por %p112, %p113
    %p116 = scmp.ne.s32.totalorder %s99, %s115
    %p117 = scmp.eq.s32.totalorder %s19, 0
    %p118 = por %p116, %p117
    %s120 = sadd.s32 %s119, 1
    %p123 = scmp.eq.s32.totalorder %s13, 3
    %p124 = scmp.ne.s32.totalorder %s119, %s121
    %p125 = scmp.eq.s32.totalorder %s13, 0
    %p126 = por %p124, %p125
    %p127 = scmp.ne.s32.totalorder %s119, %s121
    %p128 = scmp.eq.s32.totalorder %s18, 3
    %p129 = por %p127, %p128
    %p130 = scmp.ne.s32.totalorder %s121, %s122
    %p131 = scmp.eq.s32.totalorder %s18, 0
    %p132 = por %p130, %p131
    %p133 = scmp.ne.s32.totalorder %s121, %s122
    %p134 = scmp.eq.s32.totalorder %s19, 3
    %p135 = por %p133, %p134
    %p137 = scmp.ne.s32.totalorder %s122, %s136
    %p138 = scmp.eq.s32.totalorder %s19, 0
    %p139 = por %p137, %p138
    %s141 = sadd.s32 %s140, 1
    %p144 = scmp.eq.s32.totalorder %s13, 3
    %p145 = scmp.ne.s32.totalorder %s140, %s142
    %p146 = scmp.eq.s32.totalorder %s13, 0
    %p147 = por %p145, %p146
    %p148 = scmp.ne.s32.totalorder %s140, %s142
    %p149 = scmp.eq.s32.totalorder %s18, 3
    %p150 = por %p148, %p149
    %p151 = scmp.ne.s32.totalorder %s142, %s143
    %p152 = scmp.eq.s32.totalorder %s18, 0
    %p153 = por %p151, %p152
    %p154 = scmp.ne.s32.totalorder %s142, %s143
    %p155 = scmp.eq.s32.totalorder %s19, 3
    %p156 = por %p154, %p155
    %p158 = scmp.ne.s32.totalorder %s143, %s157
    %p159 = scmp.eq.s32.totalorder %s19, 0
    %p160 = por %p158, %p159
    %s162 = sadd.s32 %s161, 1
    %p165 = scmp.eq.s32.totalorder %s13, 3
    %p166 = scmp.ne.s32.totalorder %s161, %s163
    %p167 = scmp.eq.s32.totalorder %s13, 0
    %p168 = por %p166, %p167
    %p169 = scmp.ne.s32.totalorder %s161, %s163
    %p170 = scmp.eq.s32.totalorder %s18, 3
    %p171 = por %p169, %p170
    %p172 = scmp.ne.s32.totalorder %s163, %s164
    %p173 = scmp.eq.s32.totalorder %s18, 0
    %p174 = por %p172, %p173
    %p175 = scmp.ne.s32.totalorder %s163, %s164
    %p176 = scmp.eq.s32.totalorder %s19, 3
    %p177 = por %p175, %p176
    %p179 = scmp.ne.s32.totalorder %s164, %s178
    %p180 = scmp.eq.s32.totalorder %s19, 0
    %p181 = por %p179, %p180
    %s183 = sadd.s32 %s182, 1
    %p186 = scmp.eq.s32.totalorder %s13, 3
    %p187 = scmp.ne.s32.totalorder %s182, %s184
    %p188 = scmp.eq.s32.totalorder %s13, 0
    %p189 = por %p187, %p188
    %p190 = scmp.ne.s32.totalorder %s182, %s184
    %p191 = scmp.eq.s32.totalorder %s18, 3
    %p192 = por %p190, %p191
    %p193 = scmp.ne.s32.totalorder %s184, %s185
    %p194 = scmp.eq.s32.totalorder %s18, 0
    %p195 = por %p193, %p194
    %p196 = scmp.ne.s32.totalorder %s184, %s185
    %p197 = scmp.eq.s32.totalorder %s19, 3
    %p198 = por %p196, %p197
    %p200 = scmp.ne.s32.totalorder %s185, %s199
    %p201 = scmp.eq.s32.totalorder %s19, 0
    %p202 = por %p200, %p201
    %p203 = scmp.eq.s32.totalorder %s20, 3
    %s204 = scalar_select %p203, %s21, 1
    %p205 = scmp.eq.s32.totalorder %s32, 3
    %s206 = scalar_select %p205, %s28, 1
    %s207 = ssub.s32 %s204, %s206
    %p208 = scmp.eq.s32.totalorder %s207, 0
    %s210 = sadd.s32 %s209, 1
    %s211 = scalar_select %p208, %s209, %s210
    %p214 = pneg %p208
    %p215 = scmp.eq.s32.totalorder %s13, 3
    %p216 = por %p214, %p215
    %p217 = scmp.ne.s32.totalorder %s209, %s212
    %p218 = scmp.eq.s32.totalorder %s13, 0
    %p219 = por %p217, %p218
    %p220 = scmp.ne.s32.totalorder %s209, %s212
    %p221 = scmp.eq.s32.totalorder %s18, 3
    %p222 = por %p220, %p221
    %p223 = scmp.ne.s32.totalorder %s212, %s213
    %p224 = scmp.eq.s32.totalorder %s18, 0
    %p225 = por %p223, %p224
    %p226 = scmp.ne.s32.totalorder %s212, %s213
    %p227 = scmp.eq.s32.totalorder %s19, 3
    %p228 = por %p226, %p227
    %p230 = scmp.ne.s32.totalorder %s213, %s229
    %p231 = scmp.eq.s32.totalorder %s19, 0
    %p232 = por %p230, %p231
    %p233 = scmp.le.s32.totalorder 1, %s13
    %p234 = scmp.lt.s32.totalorder %s13, 5
    %p235 = pnand %p233, %p234
    %p236 = pneg %p235
    // Predicated region
    $region9: #{tpu_custom_call.1} parent=5 // pred_check
      _
    $region10: #{tpu_custom_call.1} parent=5 // pred_check_branch
      %238 = sbr.rel (%p235) target = $region12
    $region11: #{tpu_custom_call.1} parent=5 // pred_region
      %s239 = ssub.s32 %s13, 1
      // Predicated region
      $region13: #{tpu_custom_call.1} parent=11 // pred_check
        %p240 = pneg %p111
      $region14: #{tpu_custom_call.1} parent=11 // pred_check_branch
        %242 = sbr.rel (%p240) target = $region16
      $region15: #{tpu_custom_call.1} parent=11 // pred_region
        %s243 = smul.u32 8, %s23
        %p244 = scmp.lt.s32.totalorder %s243, 7
        %s245 = scalar_select %p244, %s243, 7
        %s246 = smul.addr %s245, 8
        %s247 = scalar_lea.vmem %s2, %s246
        %s248 = smul.u32 8, %s23
      $region16: #{tpu_custom_call.1} parent=11 // pred_fallthru
        _
      // Predicated region
      $region17: #{tpu_custom_call.1} parent=11 // pred_check
        %p249 = pneg %p132
      $region18: #{tpu_custom_call.1} parent=11 // pred_check_branch
        %251 = sbr.rel (%p249) target = $region20
      $region19: #{tpu_custom_call.1} parent=11 // pred_region
        _
      $region20: #{tpu_custom_call.1} parent=11 // pred_fallthru
        _
      // Predicated region
      $region21: #{tpu_custom_call.1} parent=11 // pred_check
        %p252 = pneg %p153
      $region22: #{tpu_custom_call.1} parent=11 // pred_check_branch
        %254 = sbr.rel (%p252) target = $region24
      $region23: #{tpu_custom_call.1} parent=11 // pred_region
        _
      $region24: #{tpu_custom_call.1} parent=11 // pred_fallthru
        _
      // Predicated region
      $region25: #{tpu_custom_call.1} parent=11 // pred_check
        %p255 = pneg %p174
      $region26: #{tpu_custom_call.1} parent=11 // pred_check_branch
        %257 = sbr.rel (%p255) target = $region28
      $region27: #{tpu_custom_call.1} parent=11 // pred_region
        _
      $region28: #{tpu_custom_call.1} parent=11 // pred_fallthru
        _
      // Predicated region
      $region29: #{tpu_custom_call.1} parent=11 // pred_check
        %p258 = pneg %p195
      $region30: #{tpu_custom_call.1} parent=11 // pred_check_branch
        %260 = sbr.rel (%p258) target = $region32
      $region31: #{tpu_custom_call.1} parent=11 // pred_region
        _
      $region32: #{tpu_custom_call.1} parent=11 // pred_fallthru
        _
    $region12: #{tpu_custom_call.1} parent=5 // pred_fallthru
      _
    %p261 = scmp.lt.s32.totalorder %s13, 4
    // Predicated region
    $region33: #{tpu_custom_call.1} parent=5 // pred_check
      %p262 = pneg %p261
    $region34: #{tpu_custom_call.1} parent=5 // pred_check_branch
      %264 = sbr.rel (%p262) target = $region36
    $region35: #{tpu_custom_call.1} parent=5 // pred_region
      // Predicated region
      $region37: #{tpu_custom_call.1} parent=35 // pred_check
        %p265 = pneg %p49
      $region38: #{tpu_custom_call.1} parent=35 // pred_check_branch
        %267 = sbr.rel (%p265) target = $region40
      $region39: #{tpu_custom_call.1} parent=35 // pred_region
        %p268 = scmp.eq.s32.totalorder %s20, 0
        %s269 = scalar_select %p268, %s21, 0
        %s270 = smul.u32 8, %s269
        %p271 = scmp.lt.s32.totalorder %s270, 7
        %s272 = scalar_select %p271, %s270, 7
        %s273 = smul.addr %s272, 8
        %s274 = scalar_lea.vmem %s0, %s273
        %p275 = scmp.eq.s32.totalorder %s20, 0
        %s276 = scalar_select %p275, %s21, 0
        %s277 = smul.u32 8, %s276
      $region40: #{tpu_custom_call.1} parent=35 // pred_fallthru
        _
      // Predicated region
      $region41: #{tpu_custom_call.1} parent=35 // pred_check
        %p278 = pneg %p79
      $region42: #{tpu_custom_call.1} parent=35 // pred_check_branch
        %280 = sbr.rel (%p278) target = $region44
      $region43: #{tpu_custom_call.1} parent=35 // pred_region
        %p281 = scmp.lt.s32.totalorder %s20, 3
        %s282 = scalar_select %p281, %s21, 0
        %s283 = smul.u32 8, %s282
        %p284 = scmp.lt.s32.totalorder %s283, 7
        %s285 = scalar_select %p284, %s283, 7
        %s286 = smul.addr %s285, 4
        %s287 = scalar_lea.vmem %s1, %s286
        %p288 = scmp.lt.s32.totalorder %s20, 3
        %s289 = scalar_select %p288, %s21, 0
        %s290 = smul.u32 8, %s289
      $region44: #{tpu_custom_call.1} parent=35 // pred_fallthru
        _
    $region36: #{tpu_custom_call.1} parent=5 // pred_fallthru
      _
    %p291 = scmp.le.s32.totalorder 1, %s13
    %p292 = scmp.lt.s32.totalorder %s13, 5
    %p293 = pnand %p291, %p292
    %p294 = pneg %p293
    // Predicated region
    $region45: #{tpu_custom_call.1} parent=5 // pred_check
      _
    $region46: #{tpu_custom_call.1} parent=5 // pred_check_branch
      %296 = sbr.rel (%p293) target = $region48
    $region47: #{tpu_custom_call.1} parent=5 // pred_region
      %s297 = ssub.s32 %s13, 1
      %p298 = scmp.eq.s32.totalorder %s22, 0
      %s299 = scalar_select %p298, %s23, 0
      %s300 = smul.u32 8, %s299
      %p301 = scmp.lt.s32.totalorder %s300, 7
      %s302 = scalar_select %p301, %s300, 7
      %s303 = smul.addr %s302, 8
      %s304 = scalar_lea.vmem %s0, %s303
      %p305 = pneg %p55
      %p306 = pneg %p52
      %p307 = scmp.lt.s32.totalorder %s22, 3
      %s308 = scalar_select %p307, %s23, 0
      %s309 = smul.u32 8, %s308
      %p310 = scmp.lt.s32.totalorder %s309, 7
      %s311 = scalar_select %p310, %s309, 7
      %s312 = smul.addr %s311, 4
      %s313 = scalar_lea.vmem %s1, %s312
      %p314 = pneg %p85
      %p315 = pneg %p82
      %s316 = smul.u32 8, %s23
      %p317 = scmp.lt.s32.totalorder %s316, 7
      %s318 = scalar_select %p317, %s316, 7
      %s319 = smul.addr %s318, 8
      %s320 = scalar_lea.vmem %s2, %s319
      %p321 = pneg %p111
      %p322 = pneg %p108
      %p323 = pneg %p132
      %p324 = pneg %p129
      %p325 = pneg %p153
      %p326 = pneg %p150
      %p327 = pneg %p174
      %p328 = pneg %p171
      %p329 = pneg %p195
      %p330 = pneg %p192
      %p331 = pneg %p225
      %p332 = pneg %p222
      %p333 = scmp.eq.s32.totalorder %s22, 3
      %s334 = scalar_select %p333, %s23, 1
      %p335 = scmp.lt.s32.totalorder %s334, 1
      %s336 = scalar_select %p335, %s334, 1
      %s337 = smul.addr %s336, 8
      %s338 = scalar_lea.vmem %s7, %s337
      %p339 = scmp.eq.s32.totalorder %s22, 0
      %s340 = scalar_select %p339, %s23, 0
      %s341 = smul.u32 8, %s340
      %p342 = scmp.lt.s32.totalorder %s341, 7
      %s343 = scalar_select %p342, %s341, 7
      %s344 = smul.addr %s343, 8
      %s345 = scalar_lea.vmem %s0, %s344
      %p346 = scmp.eq.s32.totalorder %s22, 0
      %s347 = scalar_select %p346, %s23, 0
      %s348 = smul.u32 8, %s347
      %p349 = scmp.lt.s32.totalorder %s22, 3
      %s350 = scalar_select %p349, %s23, 0
      %s351 = smul.u32 8, %s350
      %p352 = scmp.lt.s32.totalorder %s351, 7
      %s353 = scalar_select %p352, %s351, 7
      %s354 = smul.addr %s353, 4
      %s355 = scalar_lea.vmem %s1, %s354
      %p356 = scmp.lt.s32.totalorder %s22, 3
      %s357 = scalar_select %p356, %s23, 0
      %s358 = smul.u32 8, %s357
      %s359 = smul.u32 8, %s23
      %p360 = scmp.lt.s32.totalorder %s359, 7
      %s361 = scalar_select %p360, %s359, 7
      %s362 = smul.addr %s361, 8
      %s363 = scalar_lea.vmem %s2, %s362
      %s364 = smul.u32 8, %s23
      %p365 = scmp.eq.s32.totalorder %s22, 3
      %s366 = scalar_select %p365, %s23, 1
      %p367 = scmp.lt.s32.totalorder %s366, 1
      %s368 = scalar_select %p367, %s366, 1
      %s369 = smul.addr %s368, 8
      %s370 = scalar_lea.vmem %s7, %s369
      %p371 = scmp.eq.s32.totalorder %s22, 3
      %s372 = scalar_select %p371, %s23, 1
      %p374 = scmp.eq.s32.totalorder %s23, 0
      %p375 = scmp.lt.s32.totalorder %s22, 3
      %p376 = pnand %p374, %p375
      %p377 = pneg %p376
      // Predicated region
      $region49: #{tpu_custom_call.1} parent=47 // pred_check
        _
      $region50: #{tpu_custom_call.1} parent=47 // pred_check_branch
        %379 = sbr.rel (%p376) target = $region52
      $region51: #{tpu_custom_call.1} parent=47 // pred_region
        %s380 = smul.u32 %s22, 2
        %s381 = scalar_lea.vmem [#allocation3], %s380
        %vm382 = vcmask 254976
        %383 = vst.msk [vmem:[%s381] sm:$0x3] %vm382, 0.0
      $region52: #{tpu_custom_call.1} parent=47 // pred_fallthru
        _
      %p384 = scmp.eq.s32.totalorder %s22, 0
      // Predicated region
      $region53: #{tpu_custom_call.1} parent=47 // pred_check
        %p385 = pneg %p384
      $region54: #{tpu_custom_call.1} parent=47 // pred_check_branch
        %387 = sbr.rel (%p385) target = $region56
      $region55: #{tpu_custom_call.1} parent=47 // pred_region
        %v388 = vld [vmem:[%s345] sm:$0xff]
        %v389 = vld [vmem:[%s345 + $0x8] sm:$0xff]
        %v390 = vld [vmem:[%s345 + $0x10] sm:$0xff]
        %v391 = vld [vmem:[%s345 + $0x18] sm:$0xff]
        %v392 = vld [vmem:[%s345 + $0x20] sm:$0xff]
        %v393 = vld [vmem:[%s345 + $0x28] sm:$0xff]
        %v394 = vld [vmem:[%s345 + $0x30] sm:$0xff]
        %v395 = vld [vmem:[%s345 + $0x38] sm:$0xff]
        %s396 = smul.u32 %s23, 64
        %s397 = scalar_lea.vmem [#allocation2], %s396
        %vm398 = vcmask 261120
        %399 = vst.msk [vmem:[%s397] sm:$0xff] %vm398, %v388
        %400 = vst.msk [vmem:[%s397 + $0x8] sm:$0xff] %vm398, %v389
        %401 = vst.msk [vmem:[%s397 + $0x10] sm:$0xff] %vm398, %v390
        %402 = vst.msk [vmem:[%s397 + $0x18] sm:$0xff] %vm398, %v391
        %403 = vst.msk [vmem:[%s397 + $0x20] sm:$0xff] %vm398, %v392
        %404 = vst.msk [vmem:[%s397 + $0x28] sm:$0xff] %vm398, %v393
        %405 = vst.msk [vmem:[%s397 + $0x30] sm:$0xff] %vm398, %v394
        %406 = vst.msk [vmem:[%s397 + $0x38] sm:$0xff] %vm398, %v395
      $region56: #{tpu_custom_call.1} parent=47 // pred_fallthru
        _
      %v407 = vld [vmem:[%s363] sm:$0xff]
      %v408 = vld [vmem:[%s363 + $0x8] sm:$0xff]
      %v409 = vld [vmem:[%s363 + $0x10] sm:$0xff]
      %v410 = vld [vmem:[%s363 + $0x18] sm:$0xff]
      %v411 = vld [vmem:[%s363 + $0x20] sm:$0xff]
      %v412 = vld [vmem:[%s363 + $0x28] sm:$0xff]
      %v413 = vld [vmem:[%s363 + $0x30] sm:$0xff]
      %v414 = vld [vmem:[%s363 + $0x38] sm:$0xff]
      %s415 = smul.u32 %s23, 64
      %s416 = scalar_lea.vmem [#allocation2], %s415
      %v417 = vld [vmem:[%s416] sm:$0xff]
      %v418 = vld [vmem:[%s416 + $0x8] sm:$0xff]
      %v419 = vld [vmem:[%s416 + $0x10] sm:$0xff]
      %v420 = vld [vmem:[%s416 + $0x18] sm:$0xff]
      %v421 = vld [vmem:[%s416 + $0x20] sm:$0xff]
      %v422 = vld [vmem:[%s416 + $0x28] sm:$0xff]
      %v423 = vld [vmem:[%s416 + $0x30] sm:$0xff]
      %v424 = vld [vmem:[%s416 + $0x38] sm:$0xff]
      %s425 = ssub.s32 %s22, 1
      %p426 = scmp.gt.s32.totalorder %s425, 0
      %s427 = scalar_select %p426, %s425, 0
      %s428 = smul.u32 %s427, 2
      %s429 = scalar_lea.vmem [#allocation3], %s428
      %v430 = vld [vmem:[%s429] sm:$0x3]
      %v431 = vmul.f32 %v430, 0.07692308
      %v432 = vmul.f32 %v431, %v431
      %v434 = vrot.slane %v432, 7
      %v436 = vsub.f32 %v431, %v434
      %v437 = vmax.f32 %v436, 0.0
      %s438 = smul.u32 %s427, 4
      %s439 = scalar_lea.vmem %s4, %s438
      %v440 = vld [vmem:[%s439] sm:$0xf]
      %v441 = vperm.slane %v431, 0
      %v442 = vsub.f32 %v417, %v441
      %v443 = vsub.f32 %v418, %v441
      %v444 = vsub.f32 %v419, %v441
      %v445 = vsub.f32 %v420, %v441
      %v446 = vsub.f32 %v421, %v441
      %v447 = vsub.f32 %v422, %v441
      %v448 = vsub.f32 %v423, %v441
      %v449 = vsub.f32 %v424, %v441
      %v450 = vperm.slane %v440, 2
      %v451 = vmul.f32 %v450, %v442
      %v452 = vmul.f32 %v450, %v443
      %v453 = vmul.f32 %v450, %v444
      %v454 = vmul.f32 %v450, %v445
      %v455 = vmul.f32 %v450, %v446
      %v456 = vmul.f32 %v450, %v447
      %v457 = vmul.f32 %v450, %v448
      %v458 = vmul.f32 %v450, %v449
      %v459 = vadd.f32 %v437, 1e-05
      %v460 = vrsqrt.pop %v459
      %v461 = vmul.f32 %v460, %v459
      %v462 = vmul.f32 %v461, %v460
      %v463 = vmul.f32 0.5, %v462
      %v464 = vsub.f32 1.5, %v463
      %v465 = vmul.f32 %v460, %v464
      %vm466 = vweird.f32 %v459
      %vm467 = vweird.f32 %v460
      %vm468 = vmor %vm466, %vm467
      %v469 = vsel %vm468, %v460, %v465
      %v470 = vperm.slane %v469, 1
      %v471 = vmul.f32 %v451, %v470
      %v472 = vmul.f32 %v452, %v470
      %v473 = vmul.f32 %v453, %v470
      %v474 = vmul.f32 %v454, %v470
      %v475 = vmul.f32 %v455, %v470
      %v476 = vmul.f32 %v456, %v470
      %v477 = vmul.f32 %v457, %v470
      %v478 = vmul.f32 %v458, %v470
      %v479 = vperm.slane %v440, 3
      %v480 = vadd.f32 %v471, %v479
      %v481 = vadd.f32 %v472, %v479
      %v482 = vadd.f32 %v473, %v479
      %v483 = vadd.f32 %v474, %v479
      %v484 = vadd.f32 %v475, %v479
      %v485 = vadd.f32 %v476, %v479
      %v486 = vadd.f32 %v477, %v479
      %v487 = vadd.f32 %v478, %v479
      %s488 = scalar_select %p384, 1, 0
      %v489 = vstv %s488
      %vm490 = vcmp.eq.s32.totalorder %v489, 1
      %v491 = vsel %vm490, %v417, %v480
      %v492 = vsel %vm490, %v418, %v481
      %v493 = vsel %vm490, %v419, %v482
      %v494 = vsel %vm490, %v420, %v483
      %v495 = vsel %vm490, %v421, %v484
      %v496 = vsel %vm490, %v422, %v485
      %v497 = vsel %vm490, %v423, %v486
      %v498 = vsel %vm490, %v424, %v487
      // Predicated region
      $region57: #{tpu_custom_call.1} parent=47 // pred_check
        %p499 = pneg %p375
      $region58: #{tpu_custom_call.1} parent=47 // pred_check_branch
        %501 = sbr.rel (%p499) target = $region60
      $region59: #{tpu_custom_call.1} parent=47 // pred_region
        %s502 = smul.u32 %s22, 8
        %s503 = smul.addr %s502, 4
        %s504 = scalar_lea.vmem %s3, %s503
        %v505 = vld [vmem:[%s504] sm:$0xf]
        %v506 = vld [vmem:[%s504 + $0x4] sm:$0xf]
        %v507 = vld [vmem:[%s504 + $0x8] sm:$0xf]
        %v508 = vld [vmem:[%s504 + $0xc] sm:$0xf]
        %v509 = vld [vmem:[%s504 + $0x10] sm:$0xf]
        %v510 = vld [vmem:[%s504 + $0x14] sm:$0xf]
        %v511 = vld [vmem:[%s504 + $0x18] sm:$0xf]
        %v512 = vld [vmem:[%s504 + $0x1c] sm:$0xf]
        %s513 = smul.u32 %s22, 4
        %s514 = scalar_lea.vmem %s4, %s513
        %v515 = vld [vmem:[%s514] sm:$0xf]
        %v516 = vpack.c.bf16 %v491, %v491
        %v517 = vpack.c.bf16 %v492, %v492
        %v518 = vpack.c.bf16 %v493, %v493
        %v519 = vpack.c.bf16 %v494, %v494
        %v520 = vpack.c.bf16 %v495, %v495
        %v521 = vpack.c.bf16 %v496, %v496
        %v522 = vpack.c.bf16 %v497, %v497
        %v523 = vpack.c.bf16 %v498, %v498
        %v524 = vld [vmem:[%s355] sm:$0xf]
        %v525 = vld [vmem:[%s355 + $0x4] sm:$0xf]
        %v526 = vld [vmem:[%s355 + $0x8] sm:$0xf]
        %v527 = vld [vmem:[%s355 + $0xc] sm:$0xf]
        %v528 = vld [vmem:[%s355 + $0x10] sm:$0xf]
        %v529 = vld [vmem:[%s355 + $0x14] sm:$0xf]
        %v530 = vld [vmem:[%s355 + $0x18] sm:$0xf]
        %v531 = vld [vmem:[%s355 + $0x1c] sm:$0xf]
        %vm532 = vcmask 64512
        %v534 = vsel %vm532, %v524, 0
        %vm536 = vcmask 1043456
        %v538 = vsel %vm536, %v516, 0
        %540 = vmatpush.bf16.msra.mxu0 0
        %541 = vmatpush.bf16.msra.mxu0 0
        %542 = vmatpush.bf16.msra.mxu0 0
        %543 = vmatpush.bf16.msra.mxu0 0
        %544 = vmatpush.bf16.msra.mxu0 0
        %545 = vmatpush.bf16.msra.mxu0 0
        %546 = vmatpush.bf16.msra.mxu0 0
        %547 = vmatpush.bf16.msra.mxu0 %v538
        %548 = vmatmul.bf16.gmra.mxu0 %v534
        %v549 = vpop.f32.mrf.mxu0
        %v550 = vadd.f32 0.0, %v549
        %v551 = vpop.f32.mrf.mxu0
        %552 = vdwg.mxu0
        %v554 = vsel %vm532, %v525, 0
        %v557 = vsel %vm536, %v517, 0
        %559 = vmatpush.bf16.msra.mxu0 0
        %560 = vmatpush.bf16.msra.mxu0 0
        %561 = vmatpush.bf16.msra.mxu0 0
        %562 = vmatpush.bf16.msra.mxu0 0
        %563 = vmatpush.bf16.msra.mxu0 0
        %564 = vmatpush.bf16.msra.mxu0 0
        %565 = vmatpush.bf16.msra.mxu0 0
        %566 = vmatpush.bf16.msra.mxu0 %v557
        %567 = vmatmul.bf16.gmra.mxu0 %v554
        %v568 = vpop.f32.mrf.mxu0
        %v569 = vadd.f32 0.0, %v568
        %v570 = vpop.f32.mrf.mxu0
        %571 = vdwg.mxu0
        %v573 = vsel %vm532, %v526, 0
        %v576 = vsel %vm536, %v518, 0
        %578 = vmatpush.bf16.msra.mxu0 0
        %579 = vmatpush.bf16.msra.mxu0 0
        %580 = vmatpush.bf16.msra.mxu0 0
        %581 = vmatpush.bf16.msra.mxu0 0
        %582 = vmatpush.bf16.msra.mxu0 0
        %583 = vmatpush.bf16.msra.mxu0 0
        %584 = vmatpush.bf16.msra.mxu0 0
        %585 = vmatpush.bf16.msra.mxu0 %v576
        %586 = vmatmul.bf16.gmra.mxu0 %v573
        %v587 = vpop.f32.mrf.mxu0
        %v588 = vadd.f32 0.0, %v587
        %v589 = vpop.f32.mrf.mxu0
        %590 = vdwg.mxu0
        %v592 = vsel %vm532, %v527, 0
        %v595 = vsel %vm536, %v519, 0
        %597 = vmatpush.bf16.msra.mxu0 0
        %598 = vmatpush.bf16.msra.mxu0 0
        %599 = vmatpush.bf16.msra.mxu0 0
        %600 = vmatpush.bf16.msra.mxu0 0
        %601 = vmatpush.bf16.msra.mxu0 0
        %602 = vmatpush.bf16.msra.mxu0 0
        %603 = vmatpush.bf16.msra.mxu0 0
        %604 = vmatpush.bf16.msra.mxu0 %v595
        %605 = vmatmul.bf16.gmra.mxu0 %v592
        %v606 = vpop.f32.mrf.mxu0
        %v607 = vadd.f32 0.0, %v606
        %v608 = vpop.f32.mrf.mxu0
        %609 = vdwg.mxu0
        %v611 = vsel %vm532, %v528, 0
        %v614 = vsel %vm536, %v520, 0
        %616 = vmatpush.bf16.msra.mxu0 0
        %617 = vmatpush.bf16.msra.mxu0 0
        %618 = vmatpush.bf16.msra.mxu0 0
        %619 = vmatpush.bf16.msra.mxu0 0
        %620 = vmatpush.bf16.msra.mxu0 0
        %621 = vmatpush.bf16.msra.mxu0 0
        %622 = vmatpush.bf16.msra.mxu0 0
        %623 = vmatpush.bf16.msra.mxu0 %v614
        %624 = vmatmul.bf16.gmra.mxu0 %v611
        %v625 = vpop.f32.mrf.mxu0
        %v626 = vadd.f32 0.0, %v625
        %v627 = vpop.f32.mrf.mxu0
        %628 = vdwg.mxu0
        %v630 = vsel %vm532, %v529, 0
        %v633 = vsel %vm536, %v521, 0
        %635 = vmatpush.bf16.msra.mxu0 0
        %636 = vmatpush.bf16.msra.mxu0 0
        %637 = vmatpush.bf16.msra.mxu0 0
        %638 = vmatpush.bf16.msra.mxu0 0
        %639 = vmatpush.bf16.msra.mxu0 0
        %640 = vmatpush.bf16.msra.mxu0 0
        %641 = vmatpush.bf16.msra.mxu0 0
        %642 = vmatpush.bf16.msra.mxu0 %v633
        %643 = vmatmul.bf16.gmra.mxu0 %v630
        %v644 = vpop.f32.mrf.mxu0
        %v645 = vadd.f32 0.0, %v644
        %v646 = vpop.f32.mrf.mxu0
        %647 = vdwg.mxu0
        %v649 = vsel %vm532, %v530, 0
        %v652 = vsel %vm536, %v522, 0
        %654 = vmatpush.bf16.msra.mxu0 0
        %655 = vmatpush.bf16.msra.mxu0 0
        %656 = vmatpush.bf16.msra.mxu0 0
        %657 = vmatpush.bf16.msra.mxu0 0
        %658 = vmatpush.bf16.msra.mxu0 0
        %659 = vmatpush.bf16.msra.mxu0 0
        %660 = vmatpush.bf16.msra.mxu0 0
        %661 = vmatpush.bf16.msra.mxu0 %v652
        %662 = vmatmul.bf16.gmra.mxu0 %v649
        %v663 = vpop.f32.mrf.mxu0
        %v664 = vadd.f32 0.0, %v663
        %v665 = vpop.f32.mrf.mxu0
        %666 = vdwg.mxu0
        %v668 = vsel %vm532, %v531, 0
        %v671 = vsel %vm536, %v523, 0
        %673 = vmatpush.bf16.msra.mxu0 0
        %674 = vmatpush.bf16.msra.mxu0 0
        %675 = vmatpush.bf16.msra.mxu0 0
        %676 = vmatpush.bf16.msra.mxu0 0
        %677 = vmatpush.bf16.msra.mxu0 0
        %678 = vmatpush.bf16.msra.mxu0 0
        %679 = vmatpush.bf16.msra.mxu0 0
        %680 = vmatpush.bf16.msra.mxu0 %v671
        %681 = vmatmul.bf16.gmra.mxu0 %v668
        %v682 = vpop.f32.mrf.mxu0
        %v683 = vadd.f32 0.0, %v682
        %v684 = vpop.f32.mrf.mxu0
        %685 = vdwg.mxu0
        %v686 = vadd.f32 %v491, %v550
        %v687 = vadd.f32 %v492, %v569
        %v688 = vadd.f32 %v493, %v588
        %v689 = vadd.f32 %v494, %v607
        %v690 = vadd.f32 %v495, %v626
        %v691 = vadd.f32 %v496, %v645
        %v692 = vadd.f32 %v497, %v664
        %v693 = vadd.f32 %v498, %v683
        %v694 = vpack.c.bf16 %v687, %v686
        %v695 = vpack.c.bf16 %v689, %v688
        %v696 = vpack.c.bf16 %v691, %v690
        %v697 = vpack.c.bf16 %v693, %v692
        %v698 = vperm.slane %v515, 0
        %v703 = vunpack.c.l.b16 %v505
        %v704 = vunpack.c.l.b16 %v506
        %v705 = vunpack.c.l.b16 %v507
        %v706 = vunpack.c.l.b16 %v508
        %v707 = vpack.c.b16 %v704, %v703
        %v708 = vpack.c.b16 %v706, %v705
        %vm711 = vcmask 261120
        %v713 = vsel %vm711, %v694, 0
        %v716 = vsel %vm711, %v695, 0
        %v719 = vsel %vm711, %v696, 0
        %v722 = vsel %vm711, %v697, 0
        %724 = vmatpush.bf16.msra.mxu0 0
        %725 = vmatpush.bf16.msra.mxu0 0
        %726 = vmatpush.bf16.msra.mxu0 0
        %727 = vmatpush.bf16.msra.mxu0 0
        %728 = vmatpush.bf16.msra.mxu0 0
        %729 = vmatpush.bf16.msra.mxu0 0
        %730 = vmatpush.bf16.msra.mxu0 %v708
        %731 = vmatpush.bf16.msra.mxu0 %v707
        %732 = vmatmul.bf16.gmra.mxu0 %v713
        %v733 = vpop.f32.mrf.mxu0
        %v734 = vadd.f32 %v698, %v733
        %v735 = vpop.f32.mrf.mxu0
        %v736 = vadd.f32 %v698, %v735
        %737 = vmatmul.bf16.gmra.mxu0 %v716
        %v738 = vpop.f32.mrf.mxu0
        %v739 = vadd.f32 %v698, %v738
        %v740 = vpop.f32.mrf.mxu0
        %v741 = vadd.f32 %v698, %v740
        %742 = vmatmul.bf16.gmra.mxu0 %v719
        %v743 = vpop.f32.mrf.mxu0
        %v744 = vadd.f32 %v698, %v743
        %v745 = vpop.f32.mrf.mxu0
        %v746 = vadd.f32 %v698, %v745
        %747 = vmatmul.bf16.gmra.mxu0 %v722
        %v748 = vpop.f32.mrf.mxu0
        %v749 = vadd.f32 %v698, %v748
        %v750 = vpop.f32.mrf.mxu0
        %v751 = vadd.f32 %v698, %v750
        %752 = vdwg.mxu0
        %v753 = vmax.f32 %v734, 0.0
        %v754 = vmax.f32 %v736, 0.0
        %v755 = vmax.f32 %v739, 0.0
        %v756 = vmax.f32 %v741, 0.0
        %v757 = vmax.f32 %v744, 0.0
        %v758 = vmax.f32 %v746, 0.0
        %v759 = vmax.f32 %v749, 0.0
        %v760 = vmax.f32 %v751, 0.0
        %v761 = vpack.c.bf16 %v754, %v753
        %v762 = vpack.c.bf16 %v756, %v755
        %v763 = vpack.c.bf16 %v758, %v757
        %v764 = vpack.c.bf16 %v760, %v759
        %v765 = vperm.slane %v515, 1
        %v770 = vunpack.c.l.b16 %v509
        %v771 = vunpack.c.l.b16 %v510
        %v772 = vunpack.c.l.b16 %v511
        %v773 = vunpack.c.l.b16 %v512
        %v774 = vpack.c.b16 %v771, %v770
        %v775 = vpack.c.b16 %v773, %v772
        %v779 = vsel %vm711, %v761, 0
        %v782 = vsel %vm711, %v762, 0
        %v785 = vsel %vm711, %v763, 0
        %v788 = vsel %vm711, %v764, 0
        %790 = vmatpush.bf16.msra.mxu0 0
        %791 = vmatpush.bf16.msra.mxu0 0
        %792 = vmatpush.bf16.msra.mxu0 0
        %793 = vmatpush.bf16.msra.mxu0 0
        %794 = vmatpush.bf16.msra.mxu0 0
        %795 = vmatpush.bf16.msra.mxu0 0
        %796 = vmatpush.bf16.msra.mxu0 %v775
        %797 = vmatpush.bf16.msra.mxu0 %v774
        %798 = vmatmul.bf16.gmra.mxu0 %v779
        %v799 = vpop.f32.mrf.mxu0
        %v800 = vadd.f32 %v765, %v799
        %v801 = vpop.f32.mrf.mxu0
        %v802 = vadd.f32 %v765, %v801
        %803 = vmatmul.bf16.gmra.mxu0 %v782
        %v804 = vpop.f32.mrf.mxu0
        %v805 = vadd.f32 %v765, %v804
        %v806 = vpop.f32.mrf.mxu0
        %v807 = vadd.f32 %v765, %v806
        %808 = vmatmul.bf16.gmra.mxu0 %v785
        %v809 = vpop.f32.mrf.mxu0
        %v810 = vadd.f32 %v765, %v809
        %v811 = vpop.f32.mrf.mxu0
        %v812 = vadd.f32 %v765, %v811
        %813 = vmatmul.bf16.gmra.mxu0 %v788
        %v814 = vpop.f32.mrf.mxu0
        %v815 = vadd.f32 %v765, %v814
        %v816 = vpop.f32.mrf.mxu0
        %v817 = vadd.f32 %v765, %v816
        %818 = vdwg.mxu0
        %v819 = vmax.f32 %v800, 0.0
        %v820 = vmax.f32 %v802, 0.0
        %v821 = vmax.f32 %v805, 0.0
        %v822 = vmax.f32 %v807, 0.0
        %v823 = vmax.f32 %v810, 0.0
        %v824 = vmax.f32 %v812, 0.0
        %v825 = vmax.f32 %v815, 0.0
        %v826 = vmax.f32 %v817, 0.0
        %828 = vset.pattern.permute.xlu0 0
        %829 = vperm.xlu0 %828, %v407
        %v830 = vpop.permute.xlu0 %829
        %833 = vset.pattern.permute.xlu0 0
        %834 = vperm.xlu0 %833, %v408
        %v835 = vpop.permute.xlu0 %834
        %838 = vset.pattern.permute.xlu0 0
        %839 = vperm.xlu0 %838, %v409
        %v840 = vpop.permute.xlu0 %839
        %843 = vset.pattern.permute.xlu0 0
        %844 = vperm.xlu0 %843, %v410
        %v845 = vpop.permute.xlu0 %844
        %848 = vset.pattern.permute.xlu0 0
        %849 = vperm.xlu0 %848, %v411
        %v850 = vpop.permute.xlu0 %849
        %853 = vset.pattern.permute.xlu0 0
        %854 = vperm.xlu0 %853, %v412
        %v855 = vpop.permute.xlu0 %854
        %858 = vset.pattern.permute.xlu0 0
        %859 = vperm.xlu0 %858, %v413
        %v860 = vpop.permute.xlu0 %859
        %863 = vset.pattern.permute.xlu0 0
        %864 = vperm.xlu0 %863, %v414
        %v865 = vpop.permute.xlu0 %864
        %v867 = vmul.f32 %v819, %v830
        %v868 = vmul.f32 %v820, %v835
        %v869 = vmul.f32 %v821, %v840
        %v870 = vmul.f32 %v822, %v845
        %v871 = vmul.f32 %v823, %v850
        %v872 = vmul.f32 %v824, %v855
        %v873 = vmul.f32 %v825, %v860
        %v874 = vmul.f32 %v826, %v865
        %875 = vst.msk [vmem:[%s416] sm:$0xff] %vm711, %v867
        %876 = vst.msk [vmem:[%s416 + $0x8] sm:$0xff] %vm711, %v868
        %877 = vst.msk [vmem:[%s416 + $0x10] sm:$0xff] %vm711, %v869
        %878 = vst.msk [vmem:[%s416 + $0x18] sm:$0xff] %vm711, %v870
        %879 = vst.msk [vmem:[%s416 + $0x20] sm:$0xff] %vm711, %v871
        %880 = vst.msk [vmem:[%s416 + $0x28] sm:$0xff] %vm711, %v872
        %881 = vst.msk [vmem:[%s416 + $0x30] sm:$0xff] %vm711, %v873
        %882 = vst.msk [vmem:[%s416 + $0x38] sm:$0xff] %vm711, %v874
        %v883 = vsel %vm711, %v867, 0.0
        %v884 = vsel %vm711, %v868, 0.0
        %v885 = vadd.f32 %v883, %v884
        %v886 = vsel %vm711, %v869, 0.0
        %v887 = vadd.f32 %v885, %v886
        %v888 = vsel %vm711, %v870, 0.0
        %v889 = vadd.f32 %v887, %v888
        %v890 = vsel %vm711, %v871, 0.0
        %v891 = vadd.f32 %v889, %v890
        %v892 = vsel %vm711, %v872, 0.0
        %v893 = vadd.f32 %v891, %v892
        %v894 = vsel %vm711, %v873, 0.0
        %v895 = vadd.f32 %v893, %v894
        %v896 = vsel %vm711, %v874, 0.0
        %v897 = vadd.f32 %v895, %v896
        %v898 = vrot.slane %v897, 4
        %v899 = vadd.f32 %v897, %v898
        %v900 = vrot.slane %v899, 2
        %v901 = vadd.f32 %v899, %v900
        %v902 = vrot.slane %v901, 1
        %v903 = vadd.f32 %v901, %v902
        %v904 = vmul.f32 %v867, %v867
        %v905 = vmul.f32 %v868, %v868
        %v906 = vmul.f32 %v869, %v869
        %v907 = vmul.f32 %v870, %v870
        %v908 = vmul.f32 %v871, %v871
        %v909 = vmul.f32 %v872, %v872
        %v910 = vmul.f32 %v873, %v873
        %v911 = vmul.f32 %v874, %v874
        %v912 = vsel %vm711, %v904, 0.0
        %v913 = vsel %vm711, %v905, 0.0
        %v914 = vadd.f32 %v912, %v913
        %v915 = vsel %vm711, %v906, 0.0
        %v916 = vadd.f32 %v914, %v915
        %v917 = vsel %vm711, %v907, 0.0
        %v918 = vadd.f32 %v916, %v917
        %v919 = vsel %vm711, %v908, 0.0
        %v920 = vadd.f32 %v918, %v919
        %v921 = vsel %vm711, %v909, 0.0
        %v922 = vadd.f32 %v920, %v921
        %v923 = vsel %vm711, %v910, 0.0
        %v924 = vadd.f32 %v922, %v923
        %v925 = vsel %vm711, %v911, 0.0
        %v926 = vadd.f32 %v924, %v925
        %v927 = vrot.slane %v926, 4
        %v928 = vadd.f32 %v926, %v927
        %v929 = vrot.slane %v928, 2
        %v930 = vadd.f32 %v928, %v929
        %v931 = vrot.slane %v930, 1
        %v932 = vadd.f32 %v930, %v931
        %vm933 = vcmask 1040384
        %v934 = vsel %vm933, %v903, %v932
        %s935 = smul.u32 %s22, 2
        %s936 = scalar_lea.vmem [#allocation3], %s935
        %v937 = vld [vmem:[%s936] sm:$0x3]
        %v938 = vadd.f32 %v937, %v934
        %vm939 = vcmask 254976
        %940 = vst.msk [vmem:[%s936] sm:$0x3] %vm939, %v938
      $region60: #{tpu_custom_call.1} parent=47 // pred_fallthru
        _
      %p941 = scmp.eq.s32.totalorder %s22, 3
      // Predicated region
      $region61: #{tpu_custom_call.1} parent=47 // pred_check
        %p942 = pneg %p941
      $region62: #{tpu_custom_call.1} parent=47 // pred_check_branch
        %944 = sbr.rel (%p942) target = $region64
      $region63: #{tpu_custom_call.1} parent=47 // pred_region
        %v945 = vld [vmem:[%s363] sm:$0xff]
        %v946 = vld [vmem:[%s363 + $0x8] sm:$0xff]
        %v947 = vld [vmem:[%s363 + $0x10] sm:$0xff]
        %v948 = vld [vmem:[%s363 + $0x18] sm:$0xff]
        %v949 = vld [vmem:[%s363 + $0x20] sm:$0xff]
        %v950 = vld [vmem:[%s363 + $0x28] sm:$0xff]
        %v951 = vld [vmem:[%s363 + $0x30] sm:$0xff]
        %v952 = vld [vmem:[%s363 + $0x38] sm:$0xff]
        %vm953 = vcmp.gt.f32.partialorder %v945, 0.0
        %vm954 = vcmp.gt.f32.partialorder %v946, 0.0
        %vm955 = vcmp.gt.f32.partialorder %v947, 0.0
        %vm956 = vcmp.gt.f32.partialorder %v948, 0.0
        %vm957 = vcmp.gt.f32.partialorder %v949, 0.0
        %vm958 = vcmp.gt.f32.partialorder %v950, 0.0
        %vm959 = vcmp.gt.f32.partialorder %v951, 0.0
        %vm960 = vcmp.gt.f32.partialorder %v952, 0.0
        %v961 = vsel %vm953, 1, 0
        %v962 = vsel %vm954, 1, 0
        %v963 = vsel %vm955, 1, 0
        %v964 = vsel %vm956, 1, 0
        %v965 = vsel %vm957, 1, 0
        %v966 = vsel %vm958, 1, 0
        %v967 = vsel %vm959, 1, 0
        %v968 = vsel %vm960, 1, 0
        %969 = vset.pattern.permute.xlu0 0
        %970 = vperm.xlu0 %969, %v961
        %v971 = vpop.permute.xlu0 %970
        %972 = vset.pattern.permute.xlu0 0
        %973 = vperm.xlu0 %972, %v962
        %v974 = vpop.permute.xlu0 %973
        %975 = vset.pattern.permute.xlu0 0
        %976 = vperm.xlu0 %975, %v963
        %v977 = vpop.permute.xlu0 %976
        %978 = vset.pattern.permute.xlu0 0
        %979 = vperm.xlu0 %978, %v964
        %v980 = vpop.permute.xlu0 %979
        %981 = vset.pattern.permute.xlu0 0
        %982 = vperm.xlu0 %981, %v965
        %v983 = vpop.permute.xlu0 %982
        %984 = vset.pattern.permute.xlu0 0
        %985 = vperm.xlu0 %984, %v966
        %v986 = vpop.permute.xlu0 %985
        %987 = vset.pattern.permute.xlu0 0
        %988 = vperm.xlu0 %987, %v967
        %v989 = vpop.permute.xlu0 %988
        %990 = vset.pattern.permute.xlu0 0
        %991 = vperm.xlu0 %990, %v968
        %v992 = vpop.permute.xlu0 %991
        %vm993 = vcmp.eq.s32.totalorder %v971, 1
        %vm994 = vcmp.eq.s32.totalorder %v974, 1
        %vm995 = vcmp.eq.s32.totalorder %v977, 1
        %vm996 = vcmp.eq.s32.totalorder %v980, 1
        %vm997 = vcmp.eq.s32.totalorder %v983, 1
        %vm998 = vcmp.eq.s32.totalorder %v986, 1
        %vm999 = vcmp.eq.s32.totalorder %v989, 1
        %vm1000 = vcmp.eq.s32.totalorder %v992, 1
        %v1001 = vsel %vm993, %v491, -1e+30
        %v1002 = vsel %vm994, %v492, -1e+30
        %v1003 = vsel %vm995, %v493, -1e+30
        %v1004 = vsel %vm996, %v494, -1e+30
        %v1005 = vsel %vm997, %v495, -1e+30
        %v1006 = vsel %vm998, %v496, -1e+30
        %v1007 = vsel %vm999, %v497, -1e+30
        %v1008 = vsel %vm1000, %v498, -1e+30
        %vm1009 = vcmask 261120
        %v1010 = vsel %vm1009, %v1001, -inf
        %v1011 = vrot.slane %v1010, 4
        %v1012 = vmax.f32 %v1010, %v1011
        %v1013 = vrot.slane %v1012, 2
        %v1014 = vmax.f32 %v1012, %v1013
        %v1015 = vrot.slane %v1014, 1
        %v1016 = vmax.f32 %v1014, %v1015
        %v1017 = vsel %vm1009, %v1002, -inf
        %v1018 = vrot.slane %v1017, 4
        %v1019 = vmax.f32 %v1017, %v1018
        %v1020 = vrot.slane %v1019, 2
        %v1021 = vmax.f32 %v1019, %v1020
        %v1022 = vrot.slane %v1021, 1
        %v1023 = vmax.f32 %v1021, %v1022
        %v1024 = vsel %vm1009, %v1003, -inf
        %v1025 = vrot.slane %v1024, 4
        %v1026 = vmax.f32 %v1024, %v1025
        %v1027 = vrot.slane %v1026, 2
        %v1028 = vmax.f32 %v1026, %v1027
        %v1029 = vrot.slane %v1028, 1
        %v1030 = vmax.f32 %v1028, %v1029
        %v1031 = vsel %vm1009, %v1004, -inf
        %v1032 = vrot.slane %v1031, 4
        %v1033 = vmax.f32 %v1031, %v1032
        %v1034 = vrot.slane %v1033, 2
        %v1035 = vmax.f32 %v1033, %v1034
        %v1036 = vrot.slane %v1035, 1
        %v1037 = vmax.f32 %v1035, %v1036
        %v1038 = vsel %vm1009, %v1005, -inf
        %v1039 = vrot.slane %v1038, 4
        %v1040 = vmax.f32 %v1038, %v1039
        %v1041 = vrot.slane %v1040, 2
        %v1042 = vmax.f32 %v1040, %v1041
        %v1043 = vrot.slane %v1042, 1
        %v1044 = vmax.f32 %v1042, %v1043
        %v1045 = vsel %vm1009, %v1006, -inf
        %v1046 = vrot.slane %v1045, 4
        %v1047 = vmax.f32 %v1045, %v1046
        %v1048 = vrot.slane %v1047, 2
        %v1049 = vmax.f32 %v1047, %v1048
        %v1050 = vrot.slane %v1049, 1
        %v1051 = vmax.f32 %v1049, %v1050
        %v1052 = vsel %vm1009, %v1007, -inf
        %v1053 = vrot.slane %v1052, 4
        %v1054 = vmax.f32 %v1052, %v1053
        %v1055 = vrot.slane %v1054, 2
        %v1056 = vmax.f32 %v1054, %v1055
        %v1057 = vrot.slane %v1056, 1
        %v1058 = vmax.f32 %v1056, %v1057
        %v1059 = vsel %vm1009, %v1008, -inf
        %v1060 = vrot.slane %v1059, 4
        %v1061 = vmax.f32 %v1059, %v1060
        %v1062 = vrot.slane %v1061, 2
        %v1063 = vmax.f32 %v1061, %v1062
        %v1064 = vrot.slane %v1063, 1
        %v1065 = vmax.f32 %v1063, %v1064
        %v1066 = vld [vmem:[%s5] sm:$0xf]
        %v1067 = vld [vmem:[%s5 + $0x4] sm:$0xf]
        %v1068 = vld [vmem:[%s5 + $0x8] sm:$0xf]
        %v1069 = vld [vmem:[%s5 + $0xc] sm:$0xf]
        %v1070 = vld [vmem:[%s5 + $0x10] sm:$0xf]
        %v1071 = vld [vmem:[%s5 + $0x14] sm:$0xf]
        %v1072 = vld [vmem:[%s5 + $0x18] sm:$0xf]
        %v1073 = vld [vmem:[%s5 + $0x1c] sm:$0xf]
        %v1074 = vld [vmem:[%s5 + $0x20] sm:$0xf]
        %v1075 = vld [vmem:[%s5 + $0x24] sm:$0xf]
        %v1076 = vld [vmem:[%s5 + $0x28] sm:$0xf]
        %v1077 = vld [vmem:[%s5 + $0x2c] sm:$0xf]
        %v1078 = vld [vmem:[%s5 + $0x30] sm:$0xf]
        %v1079 = vld [vmem:[%s5 + $0x34] sm:$0xf]
        %v1080 = vld [vmem:[%s5 + $0x38] sm:$0xf]
        %v1081 = vld [vmem:[%s5 + $0x3c] sm:$0xf]
        %v1082 = vld [vmem:[%s6] sm:$0xf]
        %v1083 = vpack.c.bf16 %v1016, %v1016
        %v1084 = vpack.c.bf16 %v1023, %v1023
        %v1085 = vpack.c.bf16 %v1030, %v1030
        %v1086 = vpack.c.bf16 %v1037, %v1037
        %v1087 = vpack.c.bf16 %v1044, %v1044
        %v1088 = vpack.c.bf16 %v1051, %v1051
        %v1089 = vpack.c.bf16 %v1058, %v1058
        %v1090 = vpack.c.bf16 %v1065, %v1065
        %v1091 = vperm.slane %v1082, 0
        %v1100 = vunpack.c.l.b16 %v1083
        %v1101 = vunpack.c.l.b16 %v1084
        %v1102 = vunpack.c.l.b16 %v1085
        %v1103 = vunpack.c.l.b16 %v1086
        %v1104 = vunpack.c.l.b16 %v1087
        %v1105 = vunpack.c.l.b16 %v1088
        %v1106 = vunpack.c.l.b16 %v1089
        %v1107 = vunpack.c.l.b16 %v1090
        %vm1108 = vcmask 1041409
        %v1109 = vsel %vm1108, %v1101, %v1100
        %vm1110 = vcmask 1042434
        %v1111 = vsel %vm1110, %v1102, %v1109
        %vm1112 = vcmask 1043459
        %v1113 = vsel %vm1112, %v1103, %v1111
        %vm1114 = vcmask 1044484
        %v1115 = vsel %vm1114, %v1104, %v1113
        %vm1116 = vcmask 1045509
        %v1117 = vsel %vm1116, %v1105, %v1115
        %vm1118 = vcmask 1046534
        %v1119 = vsel %vm1118, %v1106, %v1117
        %vm1120 = vcmask 1047559
        %v1121 = vsel %vm1120, %v1107, %v1119
        %v1122 = vpack.c.b16 %v1121, %v1121
        %v1127 = vunpack.c.l.b16 %v1066
        %v1128 = vunpack.c.l.b16 %v1067
        %v1129 = vunpack.c.l.b16 %v1068
        %v1130 = vunpack.c.l.b16 %v1069
        %v1131 = vpack.c.b16 %v1128, %v1127
        %v1132 = vpack.c.b16 %v1130, %v1129
        %v1136 = vsel %vm1009, %v1122, 0
        %1138 = vmatpush.bf16.msra.mxu0 0
        %1139 = vmatpush.bf16.msra.mxu0 0
        %1140 = vmatpush.bf16.msra.mxu0 0
        %1141 = vmatpush.bf16.msra.mxu0 0
        %1142 = vmatpush.bf16.msra.mxu0 0
        %1143 = vmatpush.bf16.msra.mxu0 0
        %1144 = vmatpush.bf16.msra.mxu0 %v1132
        %1145 = vmatpush.bf16.msra.mxu0 %v1131
        %1146 = vmatmul.bf16.gmra.mxu0 %v1136
        %v1147 = vpop.f32.mrf.mxu0
        %v1148 = vadd.f32 %v1091, %v1147
        %v1149 = vpop.f32.mrf.mxu0
        %1150 = vdwg.mxu0
        %vm1151 = vcmp.gt.f32.partialorder %v1148, 0.0
        %v1152 = vmul.f32 %v1148, 0.025
        %v1153 = vsel %vm1151, %v1148, %v1152
        %v1154 = vpack.c.bf16 %v1153, %v1153
        %v1155 = vperm.slane %v1082, 1
        %v1164 = vunpack.c.l.b16 %v1070
        %v1165 = vunpack.c.l.b16 %v1071
        %v1166 = vunpack.c.l.b16 %v1072
        %v1167 = vunpack.c.l.b16 %v1073
        %v1168 = vunpack.c.l.b16 %v1074
        %v1169 = vunpack.c.l.b16 %v1075
        %v1170 = vunpack.c.l.b16 %v1076
        %v1171 = vunpack.c.l.b16 %v1077
        %v1172 = vpack.c.b16 %v1165, %v1164
        %v1173 = vpack.c.b16 %v1167, %v1166
        %v1174 = vpack.c.b16 %v1169, %v1168
        %v1175 = vpack.c.b16 %v1171, %v1170
        %vm1180 = vcmask 523264
        %v1182 = vsel %vm1180, %v1154, 0
        %1184 = vmatpush.bf16.msra.mxu0 0
        %1185 = vmatpush.bf16.msra.mxu0 0
        %1186 = vmatpush.bf16.msra.mxu0 0
        %1187 = vmatpush.bf16.msra.mxu0 0
        %1188 = vmatpush.bf16.msra.mxu0 %v1175
        %1189 = vmatpush.bf16.msra.mxu0 %v1174
        %1190 = vmatpush.bf16.msra.mxu0 %v1173
        %1191 = vmatpush.bf16.msra.mxu0 %v1172
        %1192 = vmatmul.bf16.gmra.mxu0 %v1182
        %v1193 = vpop.f32.mrf.mxu0
        %v1194 = vadd.f32 %v1155, %v1193
        %v1195 = vpop.f32.mrf.mxu0
        %1196 = vdwg.mxu0
        %vm1197 = vcmp.gt.f32.partialorder %v1194, 0.0
        %v1198 = vmul.f32 %v1194, 0.025
        %v1199 = vsel %vm1197, %v1194, %v1198
        %v1200 = vpack.c.bf16 %v1199, %v1199
        %v1201 = vperm.slane %v1082, 2
        %v1206 = vunpack.c.l.b16 %v1078
        %v1207 = vunpack.c.l.b16 %v1079
        %v1208 = vunpack.c.l.b16 %v1080
        %v1209 = vunpack.c.l.b16 %v1081
        %v1210 = vpack.c.b16 %v1207, %v1206
        %v1211 = vpack.c.b16 %v1209, %v1208
        %v1215 = vsel %vm1009, %v1200, 0
        %1217 = vmatpush.bf16.msra.mxu0 0
        %1218 = vmatpush.bf16.msra.mxu0 0
        %1219 = vmatpush.bf16.msra.mxu0 0
        %1220 = vmatpush.bf16.msra.mxu0 0
        %1221 = vmatpush.bf16.msra.mxu0 0
        %1222 = vmatpush.bf16.msra.mxu0 0
        %1223 = vmatpush.bf16.msra.mxu0 %v1211
        %1224 = vmatpush.bf16.msra.mxu0 %v1210
        %1225 = vmatmul.bf16.gmra.mxu0 %v1215
        %v1226 = vpop.f32.mrf.mxu0
        %v1227 = vadd.f32 %v1201, %v1226
        %v1228 = vpop.f32.mrf.mxu0
        %1229 = vdwg.mxu0
        %vm1230 = vcmask 64512
        %1231 = vst.msk [vmem:[%s370] sm:$0xff] %vm1230, %v1227
      $region64: #{tpu_custom_call.1} parent=47 // pred_fallthru
        _
      %p1232 = scmp.eq.s32.totalorder %s22, 3
      %s1233 = scalar_select %p1232, %s23, 1
      %p1234 = scmp.lt.s32.totalorder %s1233, 1
      %s1235 = scalar_select %p1234, %s1233, 1
      %s1236 = smul.addr %s1235, 8
      %s1237 = scalar_lea.vmem %s7, %s1236
      // Predicated region
      $region65: #{tpu_custom_call.1} parent=47 // pred_check
        %p1238 = pneg %p222
      $region66: #{tpu_custom_call.1} parent=47 // pred_check_branch
        %1240 = sbr.rel (%p1238) target = $region68
      $region67: #{tpu_custom_call.1} parent=47 // pred_region
        %p1241 = scmp.eq.s32.totalorder %s22, 3
        %s1242 = scalar_select %p1241, %s23, 1
      $region68: #{tpu_custom_call.1} parent=47 // pred_fallthru
        _
    $region48: #{tpu_custom_call.1} parent=5 // pred_fallthru
      _
    %p1243 = scmp.le.s32.totalorder 2, %s13
    // Predicated region
    $region69: #{tpu_custom_call.1} parent=5 // pred_check
      %p1244 = pneg %p1243
    $region70: #{tpu_custom_call.1} parent=5 // pred_check_branch
      %1246 = sbr.rel (%p1244) target = $region72
    $region71: #{tpu_custom_call.1} parent=5 // pred_region
      %s1247 = ssub.s32 %s13, 2
      // Predicated region
      $region73: #{tpu_custom_call.1} parent=71 // pred_check
        %p1248 = pneg %p228
      $region74: #{tpu_custom_call.1} parent=71 // pred_check_branch
        %1250 = sbr.rel (%p1248) target = $region76
      $region75: #{tpu_custom_call.1} parent=71 // pred_region
        %p1251 = scmp.eq.s32.totalorder %s24, 3
        %s1252 = scalar_select %p1251, %s25, 1
        %p1253 = scmp.lt.s32.totalorder %s1252, 1
        %s1254 = scalar_select %p1253, %s1252, 1
        %s1255 = smul.addr %s1254, 8
        %s1256 = scalar_lea.vmem %s7, %s1255
      $region76: #{tpu_custom_call.1} parent=71 // pred_fallthru
        _
    $region72: #{tpu_custom_call.1} parent=5 // pred_fallthru
      _
  $region6: #{tpu_custom_call.1} parent=0 // loop_footer
    %s17 = sadd.s32 1, %s13
  $region7: #{tpu_custom_call.1} parent=0 // loop_footer_branch
    %12 = sbr.rel target = $region3
  $region8: #{tpu_custom_call.1} parent=0 // loop_exit
    _

</llo_original>
